<compile_context>
chip_gen: v5e
topology: v5e:2x2
jax: 0.10.0
libtpu: 0.0.40
codegen_flags: <defaults>
</compile_context>

<pallas_src>
import functools
import math

import jax
import jax.numpy as jnp
from jax import lax
from jax.experimental import pallas as pl
from jax.experimental.pallas import tpu as pltpu

LN_EPS = 1e-5  # nn.LayerNorm default


def _patch_merging_kernel(xe_ref, xo_ref, we_ref, wo_ref, s_ref, b_ref, o_ref, *,
                          matmul_dtype):
    # xe_ref/xo_ref: (tr, W2, 2C)  even-/odd-input-row slabs; channel axis packs (dw, c),
    #                i.e. even slab rows are [x0 | x2], odd slab rows are [x1 | x3].
    # we_ref/wo_ref: (2C, N)       gamma-folded weight rows matching the slab channel order.
    # s_ref, b_ref : (1, N) f32    (gamma @ W) and (beta @ W).
    # o_ref        : (tr*W2, N)    flat, dense output rows.
    tr, w2, k2 = xe_ref.shape
    rows = tr * w2

    e3 = xe_ref[...]
    o3 = xo_ref[...]

    # LayerNorm statistics in f32 on the un-flattened 3-D slabs (no relayout needed),
    # one-pass mean / E[x^2]; variance clamped at 0 against f32 cancellation.
    ef = e3.astype(jnp.float32)
    of = o3.astype(jnp.float32)
    inv_k = 1.0 / (2.0 * k2)                      # 1 / (4*C)
    sum_x = jnp.sum(ef, axis=-1, keepdims=True) + jnp.sum(of, axis=-1, keepdims=True)
    sum_x2 = (jnp.sum(ef * ef, axis=-1, keepdims=True)
              + jnp.sum(of * of, axis=-1, keepdims=True))
    mean = (sum_x * inv_k).reshape(rows, 1)
    var = jnp.maximum(sum_x2.reshape(rows, 1) * inv_k - mean * mean, 0.0)
    r = lax.rsqrt(var + LN_EPS)

    # Cast to the MXU dtype *before* the (tr, W2, 2C) -> (rows, 2C) merge so the sublane
    # relayout this implies when W2 % 8 != 0 (Swin W2 = 28/14/7) moves half the bytes;
    # the XLU copy work is hidden under the tile DMA (kernel is HBM-bound).
    e2 = e3.astype(matmul_dtype).reshape(rows, k2)
    o2 = o3.astype(matmul_dtype).reshape(rows, k2)

    # x @ (gamma * W) per slab on the MXU, f32 accumulation.  (Two K=2C pushes; a single
    # K=4C GEMM would need a VMEM concat of the slabs -- not worth it while HBM-bound.)
    acc = jnp.dot(e2, we_ref[...], preferred_element_type=jnp.float32)
    acc = acc + jnp.dot(o2, wo_ref[...], preferred_element_type=jnp.float32)

    y = r * (acc - mean * s_ref[...]) + b_ref[...]
    o_ref[...] = y.astype(o_ref.dtype)


def _tpu_vmem_budget_and_cores():
    """Queried VMEM budget (~70% of capacity) and whether 2 TCs share the parallel axis."""
    vmem_cap = 128 * 2**20
    try:
        vmem_cap = int(pltpu.get_tpu_info().vmem_capacity_bytes)
    except Exception:
        pass
    two_cores = False
    try:
        kind = jax.devices()[0].device_kind.lower()
        two_cores = any(t in kind for t in ("v4", "v5p", "v7"))
    except Exception:
        pass
    # Leave headroom for compiler scratch / semaphores (matters most on v7x: 64 MiB/TC).
    return int(0.70 * vmem_cap), two_cores


def _pick_row_tile(R, W2, K2, N, x_item, o_item, w_item, rows_per_tile,
                   vmem_budget, two_cores):
    """Pick tr (super-rows per grid step) honoring tiling, VMEM budget and core split."""
    sub = max(1, 32 // o_item)                 # sublane tile of the output dtype
    g = sub // math.gcd(W2, sub)               # tr multiple of g keeps tr*W2 sublane-aligned

    if rows_per_tile is None:
        # HBM-bound: large tiles amortize per-step overhead; last Swin stage uses smaller.
        rows_per_tile = 2048 if K2 <= 768 else 512

    def step_bytes(tr_):
        rows = tr_ * W2
        in_b = 2 * rows * K2 * x_item                             # two slabs, per buffer
        out_b = rows * N * o_item
        tmp_b = rows * (2 * K2 * 4 + 2 * K2 * w_item + N * 4)     # f32 copies, casts, acc
        wgt_b = 2 * K2 * N * w_item + 2 * N * 4                   # single-buffered consts
        return 2 * (in_b + out_b) + tmp_b + wgt_b + (1 << 20)

    tr = max(1, min(rows_per_tile // max(W2, 1), R))
    if tr < R:
        tr = max(g, (tr // g) * g)
    while tr > g and step_bytes(tr) > vmem_budget:
        tr = max(g, ((tr // 2) // g) * g)
    if tr >= R:
        tr = R

    grid_r = pl.cdiv(R, tr)
    # 2-TC parts: keep the "parallel" axis even so both cores get equal work.
    if two_cores and R >= 2 and grid_r % 2:
        target = grid_r + 1 if grid_r > 1 else 2
        cand = max(1, pl.cdiv(R, target))
        cand = max(g, (cand // g) * g)
        if cand < R and pl.cdiv(R, cand) % 2 == 0:
            tr = cand
            grid_r = pl.cdiv(R, cand)
    return tr, grid_r


def patch_merging_nhwc(x_nhwc, gamma, beta, weight, *, rows_per_tile=None,
                       matmul_dtype=jnp.bfloat16, out_dtype=None):
    """Fused LayerNorm(4C) + Linear(4C->N) over 2x2 merged patches (NHWC in / NHWC out).

    Preferred entry point: no HBM layout pass -- the 2x2 gather is a free row-major
    view and the kernel output is already NHWC-flat.  For this bandwidth-bound op,
    pass bf16 activations (and bf16 out_dtype) if the model tolerates it; LN stats
    and matmul accumulation stay in f32 regardless.
    """
    B, H, W, C = x_nhwc.shape
    assert H % 2 == 0 and W % 2 == 0, "spatial dims must be even"
    K4, N = weight.shape
    assert K4 == 4 * C, (K4, C)
    H2, W2 = H // 2, W // 2
    R = B * H2                          # "super rows": each covers W2 merged patches
    K2 = 2 * C
    rows_total = R * W2
    out_dtype = x_nhwc.dtype if out_dtype is None else out_dtype

    # Free row-major view: (B*H2, dh, W2, (dw, c)).  Even/odd dh slabs are DMA'd as two
    # separate inputs, so the (B,H2,W2,4C) concat never exists in HBM or VMEM.
    xv = x_nhwc.reshape(R, 2, W2, K2)

    # Fold the LayerNorm affine into the linear; reorder rows to match the slab layout.
    gamma_f = gamma.astype(jnp.float32)
    beta_f = beta.astype(jnp.float32)
    w_f = weight.astype(jnp.float32)
    wp = gamma_f[:, None] * w_f                                   # (4C, N)
    s_row = (gamma_f @ w_f)[None, :]                              # (1, N)
    bias_row = (beta_f @ w_f)[None, :]                            # (1, N)
    w_even = jnp.concatenate([wp[0:C], wp[2 * C:3 * C]], axis=0).astype(matmul_dtype)
    w_odd = jnp.concatenate([wp[C:2 * C], wp[3 * C:4 * C]], axis=0).astype(matmul_dtype)

    vmem_budget, two_cores = _tpu_vmem_budget_and_cores()
    x_item = jnp.dtype(x_nhwc.dtype).itemsize
    o_item = jnp.dtype(out_dtype).itemsize
    w_item = jnp.dtype(matmul_dtype).itemsize
    tr, grid_r = _pick_row_tile(R, W2, K2, N, x_item, o_item, w_item,
                                rows_per_tile, vmem_budget, two_cores)

    kernel = functools.partial(_patch_merging_kernel, matmul_dtype=matmul_dtype)

    def _call(single_buffer_consts):
        # Grid-invariant operands: single VMEM buffer (their index_map is constant,
        # double-buffering only wastes VMEM -- ~9.4 MiB at the C=768/N=1536 stage).
        pm = {"pipeline_mode": pl.Buffered(1)} if single_buffer_consts else {}

        def const_spec(shape):
            return pl.BlockSpec(shape, lambda i: (0, 0), **pm)

        return pl.pallas_call(
            kernel,
            out_shape=jax.ShapeDtypeStruct((rows_total, N), out_dtype),
            grid_spec=pltpu.PrefetchScalarGridSpec(
                num_scalar_prefetch=0,
                grid=(grid_r,),
                in_specs=[
                    pl.BlockSpec((tr, pl.Squeezed(), W2, K2), lambda i: (i, 0, 0, 0)),
                    pl.BlockSpec((tr, pl.Squeezed(), W2, K2), lambda i: (i, 1, 0, 0)),
                    const_spec((K2, N)),
                    const_spec((K2, N)),
                    const_spec((1, N)),
                    const_spec((1, N)),
                ],
                out_specs=pl.BlockSpec((tr * W2, N), lambda i: (i, 0)),
            ),
            compiler_params=pltpu.CompilerParams(
                dimension_semantics=("parallel",),
                vmem_limit_bytes=vmem_budget,
            ),
        )(xv, xv, w_even, w_odd, s_row, bias_row)

    try:
        y2d = _call(True)
    except Exception:
        # pipeline_mode / Buffered(1) unsupported on this jax version: default buffering.
        y2d = _call(False)

    return y2d.reshape(B, H2, W2, N)  # free row-major reshape


def patch_merging_forward(x_nchw, gamma, beta, weight, **kwargs):
    """Matches the PyTorch module: (B, C, H, W) -> (B, out_dim, H//2, W//2).

    NOTE(perf): the two permutes below are pure HBM traffic around a bandwidth-bound
    kernel and exist only to honor the module's NCHW interface; an NHWC-resident
    model should call `patch_merging_nhwc` directly and skip both.
    """
    # TODO(synk): if the surrounding model runs NHWC end-to-end, delete this adapter
    # (and its two layout passes) and call patch_merging_nhwc directly.
    x_nhwc = jnp.transpose(x_nchw, (0, 2, 3, 1))
    y = patch_merging_nhwc(x_nhwc, gamma, beta, weight, **kwargs)
    return jnp.transpose(y, (0, 3, 1, 2))


def reference_forward(x_nchw, gamma, beta, weight):
    B, C, H, W = x_nchw.shape
    x = jnp.transpose(x_nchw, (0, 2, 3, 1))
    x0 = x[:, 0::2, 0::2, :]
    x1 = x[:, 1::2, 0::2, :]
    x2 = x[:, 0::2, 1::2, :]
    x3 = x[:, 1::2, 1::2, :]
    x = jnp.concatenate([x0, x1, x2, x3], axis=-1).reshape(B, -1, 4 * C)
    mean = jnp.mean(x, axis=-1, keepdims=True)
    var = jnp.mean((x - mean) ** 2, axis=-1, keepdims=True)
    xn = (x - mean) / jnp.sqrt(var + LN_EPS) * gamma + beta
    y = xn @ weight
    y = y.reshape(B, H // 2, W // 2, -1)
    return jnp.transpose(y, (0, 3, 1, 2))


if __name__ == "__main__":
    key = jax.random.PRNGKey(0)
    B, C, H, W = 2, 4, 16, 16
    out_dim = 8

    k_x, k_w, k_g, k_b = jax.random.split(key, 4)
    x = jax.random.normal(k_x, (B, C, H, W), dtype=jnp.float32)
    gamma = 1.0 + 0.1 * jax.random.normal(k_g, (4 * C,), dtype=jnp.float32)  # LN weight
    beta = 0.05 * jax.random.normal(k_b, (4 * C,), dtype=jnp.float32)        # LN bias
    # nn.Linear weight is (out_dim, 4C); stored transposed as (4C, out_dim).
    weight = jax.random.normal(k_w, (4 * C, out_dim), dtype=jnp.float32) * 0.05

    y = patch_merging_forward(x, gamma, beta, weight)
    jax.block_until_ready(y)

    y_ref = reference_forward(x, gamma, beta, weight)
    assert y.shape == (B, out_dim, H // 2, W // 2), y.shape
    # bf16 matmul operands (f32 accumulation) -> loose tolerance vs f32 reference.
    max_err = float(jnp.max(jnp.abs(y - y_ref)))
    assert jnp.allclose(y, y_ref, atol=2e-2, rtol=2e-2), f"mismatch vs reference: {max_err}"

    print("KERNEL_OK")
</pallas_src>

<mosaic_0001>
module attributes {stable_mosaic.version = 11 : i64} {
  func.func @_patch_merging_kernel(%arg0: i32, %arg1: memref<16x1x8x8xf32, #tpu.memory_space<vmem>>, %arg2: memref<16x1x8x8xf32, #tpu.memory_space<vmem>>, %arg3: memref<8x8xbf16, #tpu.memory_space<vmem>>, %arg4: memref<8x8xbf16, #tpu.memory_space<vmem>>, %arg5: memref<1x8xf32, #tpu.memory_space<vmem>>, %arg6: memref<1x8xf32, #tpu.memory_space<vmem>>, %arg7: memref<128x8xf32, #tpu.memory_space<vmem>>) attributes {dimension_semantics = [#tpu.dimension_semantics<parallel>], iteration_bounds = array<i64: 1>, scalar_prefetch = 0 : i64, scratch_operands = 0 : i64, tpu.core_type = #tpu.core_type<tc>, window_params = [{transform_indices = @transform_0, window_bounds = array<i64: 16, 1, 8, 8>}, {transform_indices = @transform_1, window_bounds = array<i64: 16, 1, 8, 8>}, {pipeline_mode = #tpu.pipeline_mode<synchronous>, transform_indices = @transform_2, window_bounds = array<i64: 8, 8>}, {pipeline_mode = #tpu.pipeline_mode<synchronous>, transform_indices = @transform_3, window_bounds = array<i64: 8, 8>}, {pipeline_mode = #tpu.pipeline_mode<synchronous>, transform_indices = @transform_4, window_bounds = array<i64: 1, 8>}, {pipeline_mode = #tpu.pipeline_mode<synchronous>, transform_indices = @transform_5, window_bounds = array<i64: 1, 8>}, {transform_indices = @transform_6, window_bounds = array<i64: 128, 8>}]} {
    %c0 = arith.constant 0 : index
    %c0_0 = arith.constant 0 : index
    %c0_1 = arith.constant 0 : index
    %c0_2 = arith.constant 0 : index
    %0 = vector.load %arg1[%c0, %c0_0, %c0_1, %c0_2] : memref<16x1x8x8xf32, #tpu.memory_space<vmem>>, vector<16x1x8x8xf32>
    %1 = vector.shape_cast %0 : vector<16x1x8x8xf32> to vector<16x8x8xf32>
    %c0_3 = arith.constant 0 : index
    %c0_4 = arith.constant 0 : index
    %c0_5 = arith.constant 0 : index
    %c0_6 = arith.constant 0 : index
    %2 = vector.load %arg2[%c0_3, %c0_4, %c0_5, %c0_6] : memref<16x1x8x8xf32, #tpu.memory_space<vmem>>, vector<16x1x8x8xf32>
    %3 = vector.shape_cast %2 : vector<16x1x8x8xf32> to vector<16x8x8xf32>
    %cst = arith.constant dense<0.000000e+00> : vector<16x8xf32>
    %4 = vector.multi_reduction <add>, %1, %cst [2] : vector<16x8x8xf32> to vector<16x8xf32>
    %5 = vector.shape_cast %4 : vector<16x8xf32> to vector<16x8x1xf32>
    %cst_7 = arith.constant dense<0.000000e+00> : vector<16x8xf32>
    %6 = vector.multi_reduction <add>, %3, %cst_7 [2] : vector<16x8x8xf32> to vector<16x8xf32>
    %7 = vector.shape_cast %6 : vector<16x8xf32> to vector<16x8x1xf32>
    %8 = arith.addf %5, %7 : vector<16x8x1xf32>
    %9 = arith.mulf %1, %1 : vector<16x8x8xf32>
    %cst_8 = arith.constant dense<0.000000e+00> : vector<16x8xf32>
    %10 = vector.multi_reduction <add>, %9, %cst_8 [2] : vector<16x8x8xf32> to vector<16x8xf32>
    %11 = vector.shape_cast %10 : vector<16x8xf32> to vector<16x8x1xf32>
    %12 = arith.mulf %3, %3 : vector<16x8x8xf32>
    %cst_9 = arith.constant dense<0.000000e+00> : vector<16x8xf32>
    %13 = vector.multi_reduction <add>, %12, %cst_9 [2] : vector<16x8x8xf32> to vector<16x8xf32>
    %14 = vector.shape_cast %13 : vector<16x8xf32> to vector<16x8x1xf32>
    %15 = arith.addf %11, %14 : vector<16x8x1xf32>
    %cst_10 = arith.constant 6.250000e-02 : f32
    %16 = vector.broadcast %cst_10 : f32 to vector<16x8x1xf32>
    %17 = arith.mulf %8, %16 : vector<16x8x1xf32>
    %18 = vector.shape_cast %17 : vector<16x8x1xf32> to vector<128x1xf32>
    %19 = vector.shape_cast %15 : vector<16x8x1xf32> to vector<128x1xf32>
    %cst_11 = arith.constant 6.250000e-02 : f32
    %20 = vector.broadcast %cst_11 : f32 to vector<128x1xf32>
    %21 = arith.mulf %19, %20 : vector<128x1xf32>
    %22 = arith.mulf %18, %18 : vector<128x1xf32>
    %23 = arith.subf %21, %22 : vector<128x1xf32>
    %cst_12 = arith.constant 0.000000e+00 : f32
    %24 = vector.broadcast %cst_12 : f32 to vector<128x1xf32>
    %25 = arith.maximumf %23, %24 : vector<128x1xf32>
    %cst_13 = arith.constant 9.99999974E-6 : f32
    %26 = vector.broadcast %cst_13 : f32 to vector<128x1xf32>
    %27 = arith.addf %25, %26 : vector<128x1xf32>
    %28 = math.rsqrt %27 : vector<128x1xf32>
    %29 = arith.truncf %1 : vector<16x8x8xf32> to vector<16x8x8xbf16>
    %30 = vector.shape_cast %29 : vector<16x8x8xbf16> to vector<128x8xbf16>
    %31 = arith.truncf %3 : vector<16x8x8xf32> to vector<16x8x8xbf16>
    %32 = vector.shape_cast %31 : vector<16x8x8xbf16> to vector<128x8xbf16>
    %c0_14 = arith.constant 0 : index
    %c0_15 = arith.constant 0 : index
    %33 = vector.load %arg3[%c0_14, %c0_15] : memref<8x8xbf16, #tpu.memory_space<vmem>>, vector<8x8xbf16>
    %cst_16 = arith.constant dense<0.000000e+00> : vector<128x8xf32>
    %34 = tpu.matmul %30, %33, %cst_16 {dimension_numbers = #tpu.dot_dimension_numbers<[1], [0], [0], [1], [0, 0, 1, 1], [], []>} : vector<128x8xbf16>, vector<8x8xbf16>, vector<128x8xf32> -> vector<128x8xf32>
    %c0_17 = arith.constant 0 : index
    %c0_18 = arith.constant 0 : index
    %35 = vector.load %arg4[%c0_17, %c0_18] : memref<8x8xbf16, #tpu.memory_space<vmem>>, vector<8x8xbf16>
    %cst_19 = arith.constant dense<0.000000e+00> : vector<128x8xf32>
    %36 = tpu.matmul %32, %35, %cst_19 {dimension_numbers = #tpu.dot_dimension_numbers<[1], [0], [0], [1], [0, 0, 1, 1], [], []>} : vector<128x8xbf16>, vector<8x8xbf16>, vector<128x8xf32> -> vector<128x8xf32>
    %37 = arith.addf %34, %36 : vector<128x8xf32>
    %c0_20 = arith.constant 0 : index
    %c0_21 = arith.constant 0 : index
    %38 = vector.load %arg5[%c0_20, %c0_21] : memref<1x8xf32, #tpu.memory_space<vmem>>, vector<1x8xf32>
    %39 = vector.broadcast %18 : vector<128x1xf32> to vector<128x8xf32>
    %40 = vector.broadcast %38 : vector<1x8xf32> to vector<128x8xf32>
    %41 = arith.mulf %39, %40 : vector<128x8xf32>
    %42 = arith.subf %37, %41 : vector<128x8xf32>
    %43 = vector.broadcast %28 : vector<128x1xf32> to vector<128x8xf32>
    %44 = arith.mulf %43, %42 : vector<128x8xf32>
    %c0_22 = arith.constant 0 : index
    %c0_23 = arith.constant 0 : index
    %45 = vector.load %arg6[%c0_22, %c0_23] : memref<1x8xf32, #tpu.memory_space<vmem>>, vector<1x8xf32>
    %46 = vector.broadcast %45 : vector<1x8xf32> to vector<128x8xf32>
    %47 = arith.addf %44, %46 : vector<128x8xf32>
    %c0_24 = arith.constant 0 : index
    %c0_25 = arith.constant 0 : index
    %48 = vector.load %arg7[%c0_24, %c0_25] : memref<128x8xf32, #tpu.memory_space<vmem>>, vector<128x8xf32>
    tpu.vector_store %arg7[%c0_24, %c0_25], %47 {strides = array<i32>} : memref<128x8xf32, #tpu.memory_space<vmem>>, vector<128x8xf32>,
    return
  }
  func.func @transform_0(%arg0: i32) -> (i32, i32, i32, i32) {
    %c0_i32 = arith.constant 0 : i32
    %c0_i32_0 = arith.constant 0 : i32
    %c0_i32_1 = arith.constant 0 : i32
    %c0_i32_2 = arith.constant 0 : i32
    return %arg0, %c0_i32, %c0_i32_0, %c0_i32_1 : i32, i32, i32, i32
  }
  func.func @transform_1(%arg0: i32) -> (i32, i32, i32, i32) {
    %c1_i32 = arith.constant 1 : i32
    %c0_i32 = arith.constant 0 : i32
    %c0_i32_0 = arith.constant 0 : i32
    %c0_i32_1 = arith.constant 0 : i32
    return %arg0, %c1_i32, %c0_i32, %c0_i32_0 : i32, i32, i32, i32
  }
  func.func @transform_2(%arg0: i32) -> (i32, i32) {
    %c0_i32 = arith.constant 0 : i32
    %c0_i32_0 = arith.constant 0 : i32
    %c0_i32_1 = arith.constant 0 : i32
    return %c0_i32, %c0_i32_0 : i32, i32
  }
  func.func @transform_3(%arg0: i32) -> (i32, i32) {
    %c0_i32 = arith.constant 0 : i32
    %c0_i32_0 = arith.constant 0 : i32
    %c0_i32_1 = arith.constant 0 : i32
    return %c0_i32, %c0_i32_0 : i32, i32
  }
  func.func @transform_4(%arg0: i32) -> (i32, i32) {
    %c0_i32 = arith.constant 0 : i32
    %c0_i32_0 = arith.constant 0 : i32
    %c0_i32_1 = arith.constant 0 : i32
    return %c0_i32, %c0_i32_0 : i32, i32
  }
  func.func @transform_5(%arg0: i32) -> (i32, i32) {
    %c0_i32 = arith.constant 0 : i32
    %c0_i32_0 = arith.constant 0 : i32
    %c0_i32_1 = arith.constant 0 : i32
    return %c0_i32, %c0_i32_0 : i32, i32
  }
  func.func @transform_6(%arg0: i32) -> (i32, i32) {
    %c0_i32 = arith.constant 0 : i32
    %c0_i32_0 = arith.constant 0 : i32
    return %arg0, %c0_i32 : i32, i32
  }
}

module attributes {stable_mosaic.version = 11 : i64} {
  func.func @_patch_merging_kernel(%arg0: i32, %arg1: memref<16x1x8x8xf32, #tpu.memory_space<vmem>>, %arg2: memref<16x1x8x8xf32, #tpu.memory_space<vmem>>, %arg3: memref<8x8xbf16, #tpu.memory_space<vmem>>, %arg4: memref<8x8xbf16, #tpu.memory_space<vmem>>, %arg5: memref<1x8xf32, #tpu.memory_space<vmem>>, %arg6: memref<1x8xf32, #tpu.memory_space<vmem>>, %arg7: memref<128x8xf32, #tpu.memory_space<vmem>>) attributes {dimension_semantics = [#tpu.dimension_semantics<parallel>], iteration_bounds = array<i64: 1>, scalar_prefetch = 0 : i64, scratch_operands = 0 : i64, tpu.core_type = #tpu.core_type<tc>, window_params = [{transform_indices = @transform_0, window_bounds = array<i64: 16, 1, 8, 8>}, {transform_indices = @transform_1, window_bounds = array<i64: 16, 1, 8, 8>}, {pipeline_mode = #tpu.pipeline_mode<synchronous>, transform_indices = @transform_2, window_bounds = array<i64: 8, 8>}, {pipeline_mode = #tpu.pipeline_mode<synchronous>, transform_indices = @transform_3, window_bounds = array<i64: 8, 8>}, {pipeline_mode = #tpu.pipeline_mode<synchronous>, transform_indices = @transform_4, window_bounds = array<i64: 1, 8>}, {pipeline_mode = #tpu.pipeline_mode<synchronous>, transform_indices = @transform_5, window_bounds = array<i64: 1, 8>}, {transform_indices = @transform_6, window_bounds = array<i64: 128, 8>}]} {
    %c0 = arith.constant 0 : index
    %c0_0 = arith.constant 0 : index
    %c0_1 = arith.constant 0 : index
    %c0_2 = arith.constant 0 : index
    %0 = vector.load %arg1[%c0, %c0_0, %c0_1, %c0_2] : memref<16x1x8x8xf32, #tpu.memory_space<vmem>>, vector<16x1x8x8xf32>
    %1 = vector.shape_cast %0 : vector<16x1x8x8xf32> to vector<16x8x8xf32>
    %c0_3 = arith.constant 0 : index
    %c0_4 = arith.constant 0 : index
    %c0_5 = arith.constant 0 : index
    %c0_6 = arith.constant 0 : index
    %2 = vector.load %arg2[%c0_3, %c0_4, %c0_5, %c0_6] : memref<16x1x8x8xf32, #tpu.memory_space<vmem>>, vector<16x1x8x8xf32>
    %3 = vector.shape_cast %2 : vector<16x1x8x8xf32> to vector<16x8x8xf32>
    %cst = arith.constant dense<0.000000e+00> : vector<16x8xf32>
    %4 = vector.multi_reduction <add>, %1, %cst [2] : vector<16x8x8xf32> to vector<16x8xf32>
    %5 = vector.shape_cast %4 : vector<16x8xf32> to vector<16x8x1xf32>
    %cst_7 = arith.constant dense<0.000000e+00> : vector<16x8xf32>
    %6 = vector.multi_reduction <add>, %3, %cst_7 [2] : vector<16x8x8xf32> to vector<16x8xf32>
    %7 = vector.shape_cast %6 : vector<16x8xf32> to vector<16x8x1xf32>
    %8 = arith.addf %5, %7 : vector<16x8x1xf32>
    %9 = arith.mulf %1, %1 : vector<16x8x8xf32>
    %cst_8 = arith.constant dense<0.000000e+00> : vector<16x8xf32>
    %10 = vector.multi_reduction <add>, %9, %cst_8 [2] : vector<16x8x8xf32> to vector<16x8xf32>
    %11 = vector.shape_cast %10 : vector<16x8xf32> to vector<16x8x1xf32>
    %12 = arith.mulf %3, %3 : vector<16x8x8xf32>
    %cst_9 = arith.constant dense<0.000000e+00> : vector<16x8xf32>
    %13 = vector.multi_reduction <add>, %12, %cst_9 [2] : vector<16x8x8xf32> to vector<16x8xf32>
    %14 = vector.shape_cast %13 : vector<16x8xf32> to vector<16x8x1xf32>
    %15 = arith.addf %11, %14 : vector<16x8x1xf32>
    %cst_10 = arith.constant 6.250000e-02 : f32
    %16 = vector.broadcast %cst_10 : f32 to vector<16x8x1xf32>
    %17 = arith.mulf %8, %16 : vector<16x8x1xf32>
    %18 = vector.shape_cast %17 : vector<16x8x1xf32> to vector<128x1xf32>
    %19 = vector.shape_cast %15 : vector<16x8x1xf32> to vector<128x1xf32>
    %cst_11 = arith.constant 6.250000e-02 : f32
    %20 = vector.broadcast %cst_11 : f32 to vector<128x1xf32>
    %21 = arith.mulf %19, %20 : vector<128x1xf32>
    %22 = arith.mulf %18, %18 : vector<128x1xf32>
    %23 = arith.subf %21, %22 : vector<128x1xf32>
    %cst_12 = arith.constant 0.000000e+00 : f32
    %24 = vector.broadcast %cst_12 : f32 to vector<128x1xf32>
    %25 = arith.maximumf %23, %24 : vector<128x1xf32>
    %cst_13 = arith.constant 9.99999974E-6 : f32
    %26 = vector.broadcast %cst_13 : f32 to vector<128x1xf32>
    %27 = arith.addf %25, %26 : vector<128x1xf32>
    %28 = math.rsqrt %27 : vector<128x1xf32>
    %29 = arith.truncf %1 : vector<16x8x8xf32> to vector<16x8x8xbf16>
    %30 = vector.shape_cast %29 : vector<16x8x8xbf16> to vector<128x8xbf16>
    %31 = arith.truncf %3 : vector<16x8x8xf32> to vector<16x8x8xbf16>
    %32 = vector.shape_cast %31 : vector<16x8x8xbf16> to vector<128x8xbf16>
    %c0_14 = arith.constant 0 : index
    %c0_15 = arith.constant 0 : index
    %33 = vector.load %arg3[%c0_14, %c0_15] : memref<8x8xbf16, #tpu.memory_space<vmem>>, vector<8x8xbf16>
    %cst_16 = arith.constant dense<0.000000e+00> : vector<128x8xf32>
    %34 = tpu.matmul %30, %33, %cst_16 {dimension_numbers = #tpu.dot_dimension_numbers<[1], [0], [0], [1], [0, 0, 1, 1], [], []>} : vector<128x8xbf16>, vector<8x8xbf16>, vector<128x8xf32> -> vector<128x8xf32>
    %c0_17 = arith.constant 0 : index
    %c0_18 = arith.constant 0 : index
    %35 = vector.load %arg4[%c0_17, %c0_18] : memref<8x8xbf16, #tpu.memory_space<vmem>>, vector<8x8xbf16>
    %cst_19 = arith.constant dense<0.000000e+00> : vector<128x8xf32>
    %36 = tpu.matmul %32, %35, %cst_19 {dimension_numbers = #tpu.dot_dimension_numbers<[1], [0], [0], [1], [0, 0, 1, 1], [], []>} : vector<128x8xbf16>, vector<8x8xbf16>, vector<128x8xf32> -> vector<128x8xf32>
    %37 = arith.addf %34, %36 : vector<128x8xf32>
    %c0_20 = arith.constant 0 : index
    %c0_21 = arith.constant 0 : index
    %38 = vector.load %arg5[%c0_20, %c0_21] : memref<1x8xf32, #tpu.memory_space<vmem>>, vector<1x8xf32>
    %39 = vector.broadcast %18 : vector<128x1xf32> to vector<128x8xf32>
    %40 = vector.broadcast %38 : vector<1x8xf32> to vector<128x8xf32>
    %41 = arith.mulf %39, %40 : vector<128x8xf32>
    %42 = arith.subf %37, %41 : vector<128x8xf32>
    %43 = vector.broadcast %28 : vector<128x1xf32> to vector<128x8xf32>
    %44 = arith.mulf %43, %42 : vector<128x8xf32>
    %c0_22 = arith.constant 0 : index
    %c0_23 = arith.constant 0 : index
    %45 = vector.load %arg6[%c0_22, %c0_23] : memref<1x8xf32, #tpu.memory_space<vmem>>, vector<1x8xf32>
    %46 = vector.broadcast %45 : vector<1x8xf32> to vector<128x8xf32>
    %47 = arith.addf %44, %46 : vector<128x8xf32>
    %c0_24 = arith.constant 0 : index
    %c0_25 = arith.constant 0 : index
    %48 = vector.load %arg7[%c0_24, %c0_25] : memref<128x8xf32, #tpu.memory_space<vmem>>, vector<128x8xf32>
    tpu.vector_store %arg7[%c0_24, %c0_25], %47 {strides = array<i32>} : memref<128x8xf32, #tpu.memory_space<vmem>>, vector<128x8xf32>,
    return
  }
  func.func @transform_0(%arg0: i32) -> (i32, i32, i32, i32) {
    %c0_i32 = arith.constant 0 : i32
    %c0_i32_0 = arith.constant 0 : i32
    %c0_i32_1 = arith.constant 0 : i32
    %c0_i32_2 = arith.constant 0 : i32
    return %arg0, %c0_i32, %c0_i32_0, %c0_i32_1 : i32, i32, i32, i32
  }
  func.func @transform_1(%arg0: i32) -> (i32, i32, i32, i32) {
    %c1_i32 = arith.constant 1 : i32
    %c0_i32 = arith.constant 0 : i32
    %c0_i32_0 = arith.constant 0 : i32
    %c0_i32_1 = arith.constant 0 : i32
    return %arg0, %c1_i32, %c0_i32, %c0_i32_0 : i32, i32, i32, i32
  }
  func.func @transform_2(%arg0: i32) -> (i32, i32) {
    %c0_i32 = arith.constant 0 : i32
    %c0_i32_0 = arith.constant 0 : i32
    %c0_i32_1 = arith.constant 0 : i32
    return %c0_i32, %c0_i32_0 : i32, i32
  }
  func.func @transform_3(%arg0: i32) -> (i32, i32) {
    %c0_i32 = arith.constant 0 : i32
    %c0_i32_0 = arith.constant 0 : i32
    %c0_i32_1 = arith.constant 0 : i32
    return %c0_i32, %c0_i32_0 : i32, i32
  }
  func.func @transform_4(%arg0: i32) -> (i32, i32) {
    %c0_i32 = arith.constant 0 : i32
    %c0_i32_0 = arith.constant 0 : i32
    %c0_i32_1 = arith.constant 0 : i32
    return %c0_i32, %c0_i32_0 : i32, i32
  }
  func.func @transform_5(%arg0: i32) -> (i32, i32) {
    %c0_i32 = arith.constant 0 : i32
    %c0_i32_0 = arith.constant 0 : i32
    %c0_i32_1 = arith.constant 0 : i32
    return %c0_i32, %c0_i32_0 : i32, i32
  }
  func.func @transform_6(%arg0: i32) -> (i32, i32) {
    %c0_i32 = arith.constant 0 : i32
    %c0_i32_0 = arith.constant 0 : i32
    return %arg0, %c0_i32 : i32, i32
  }
}

</mosaic_0001>

<llo_original>
// kernel: tpu_custom_call.1
$region0: #{tpu_custom_call.1}
  #allocation0 [shape = 'u32[]', space=smem, size = 0x4, offset = 0x4, fixed_abs, tag = 'smem constant byte address 0x4 - core index']
  #allocation1 [shape = 'u32[72,128]{1,0:T(1,128)}', space=vmem, size = 0x9000, scoped, tag = 'internal scratch']
  %s0 = inlined_call_operand.vmem [shape: f32[16,2,8,8], index: 0, kind: input, shape index: {}]
  %s1 = inlined_call_operand.vmem [shape: f32[16,2,8,8], index: 1, kind: input, shape index: {}]
  %s2 = inlined_call_operand.vmem [shape: bf16[8,8], index: 2, kind: input, shape index: {}]
  %s3 = inlined_call_operand.vmem [shape: bf16[8,8], index: 3, kind: input, shape index: {}]
  %s4 = inlined_call_operand.vmem [shape: f32[1,8], index: 4, kind: input, shape index: {}]
  %s5 = inlined_call_operand.vmem [shape: f32[1,8], index: 5, kind: input, shape index: {}]
  %s6 = inlined_call_operand.vmem [shape: f32[128,8], index: 6, kind: output, shape index: {}]
  %s7 = sld [smem:[#allocation0]]
  $region110: #{tpu_custom_call.1} parent=0
    _
  %s9 = ssub.s32 1, %s7
  %s10 = scalar_select 0, %s9, %s7
  $region1: #{tpu_custom_call.1} parent=0
    #allocation2 [shape = 'u8[65536]{0}', space=vmem, size = 0x10000, scoped, tag = 'input window, operand 0, single buffered']
    #allocation3 [shape = 'u8[65536]{0}', space=vmem, size = 0x10000, scoped, tag = 'input window, operand 1, single buffered']
    // Predicated region
    $region2: #{tpu_custom_call.1} parent=1 // pred_check
      _
    $region3: #{tpu_custom_call.1} parent=1 // pred_check_branch
      %12 = sbr.rel (0) target = $region5
    $region4: #{tpu_custom_call.1} parent=1 // pred_region
      // Predicated region
      $region6: #{tpu_custom_call.1} parent=4 // pred_check
        _
      $region7: #{tpu_custom_call.1} parent=4 // pred_check_branch
        %14 = sbr.rel (0) target = $region9
      $region8: #{tpu_custom_call.1} parent=4 // pred_region
        // Predicated region
        $region10: #{tpu_custom_call.1} parent=8 // pred_check
          _
        $region11: #{tpu_custom_call.1} parent=8 // pred_check_branch
          %16 = sbr.rel (0) target = $region13
        $region12: #{tpu_custom_call.1} parent=8 // pred_region
          // Predicated region
          $region25: #{tpu_custom_call.1} parent=12 // pred_check
            _
          $region26: #{tpu_custom_call.1} parent=12 // pred_check_branch
            %62 = sbr.rel (0) target = $region28
          $region27: #{tpu_custom_call.1} parent=12 // pred_region
            loop: start=0, step=1, limit=1
            $region29: #{tpu_custom_call.1} parent=27 // loop_pre_header
              _
            $region30: #{tpu_custom_call.1} parent=27 // loop_header
              %s64 = sphi 0, %s68
              %p65 = scmp.ge.s32.totalorder %s64, 1
              %s69 = sphi %s0, %s0
              %s70 = sphi [#allocation2], [#allocation2]
            $region31: #{tpu_custom_call.1} parent=27 // loop_header_branch
              %67 = sbr.rel (%p65) target = $region35
            $region32: #{tpu_custom_call.1} parent=27 // loop_body
              %v71 = vld [vmem:[%s69] sm:$0xff]
              %72 = vst [vmem:[%s70] sm:$0xff] %v71
              %v73 = vld [vmem:[%s69 + $0x10] sm:$0xff]
              %74 = vst [vmem:[%s70 + $0x8] sm:$0xff] %v73
              %v75 = vld [vmem:[%s69 + $0x20] sm:$0xff]
              %76 = vst [vmem:[%s70 + $0x10] sm:$0xff] %v75
              %v77 = vld [vmem:[%s69 + $0x30] sm:$0xff]
              %78 = vst [vmem:[%s70 + $0x18] sm:$0xff] %v77
              %v79 = vld [vmem:[%s69 + $0x40] sm:$0xff]
              %80 = vst [vmem:[%s70 + $0x20] sm:$0xff] %v79
              %v81 = vld [vmem:[%s69 + $0x50] sm:$0xff]
              %82 = vst [vmem:[%s70 + $0x28] sm:$0xff] %v81
              %v83 = vld [vmem:[%s69 + $0x60] sm:$0xff]
              %84 = vst [vmem:[%s70 + $0x30] sm:$0xff] %v83
              %v85 = vld [vmem:[%s69 + $0x70] sm:$0xff]
              %86 = vst [vmem:[%s70 + $0x38] sm:$0xff] %v85
              %v87 = vld [vmem:[%s69 + $0x80] sm:$0xff]
              %88 = vst [vmem:[%s70 + $0x40] sm:$0xff] %v87
              %v89 = vld [vmem:[%s69 + $0x90] sm:$0xff]
              %90 = vst [vmem:[%s70 + $0x48] sm:$0xff] %v89
              %v91 = vld [vmem:[%s69 + $0xa0] sm:$0xff]
              %92 = vst [vmem:[%s70 + $0x50] sm:$0xff] %v91
              %v93 = vld [vmem:[%s69 + $0xb0] sm:$0xff]
              %94 = vst [vmem:[%s70 + $0x58] sm:$0xff] %v93
              %v95 = vld [vmem:[%s69 + $0xc0] sm:$0xff]
              %96 = vst [vmem:[%s70 + $0x60] sm:$0xff] %v95
              %v97 = vld [vmem:[%s69 + $0xd0] sm:$0xff]
              %98 = vst [vmem:[%s70 + $0x68] sm:$0xff] %v97
              %v99 = vld [vmem:[%s69 + $0xe0] sm:$0xff]
              %100 = vst [vmem:[%s70 + $0x70] sm:$0xff] %v99
              %v101 = vld [vmem:[%s69 + $0xf0] sm:$0xff]
              %102 = vst [vmem:[%s70 + $0x78] sm:$0xff] %v101
            $region33: #{tpu_custom_call.1} parent=27 // loop_footer
              %s68 = sadd.s32 1, %s64
            $region34: #{tpu_custom_call.1} parent=27 // loop_footer_branch
              %63 = sbr.rel target = $region30
            $region35: #{tpu_custom_call.1} parent=27 // loop_exit
              _
          $region28: #{tpu_custom_call.1} parent=12 // pred_fallthru
            _
          // Predicated region
          $region36: #{tpu_custom_call.1} parent=12 // pred_check
            _
          $region37: #{tpu_custom_call.1} parent=12 // pred_check_branch
            %104 = sbr.rel target = $region39
          $region38: #{tpu_custom_call.1} parent=12 // pred_region
            _
          $region39: #{tpu_custom_call.1} parent=12 // pred_fallthru
            _
        $region13: #{tpu_custom_call.1} parent=8 // pred_fallthru
          _
        // Predicated region
        $region14: #{tpu_custom_call.1} parent=8 // pred_check
          _
        $region15: #{tpu_custom_call.1} parent=8 // pred_check_branch
          %18 = sbr.rel target = $region17
        $region16: #{tpu_custom_call.1} parent=8 // pred_region
          %s20 = ssub.s32 256, 1
          loop: start=0, step=1, limit=1
          $region18: #{tpu_custom_call.1} parent=16 // loop_pre_header
            _
          $region19: #{tpu_custom_call.1} parent=16 // loop_header
            %s22 = sphi 0, %s26
            %p23 = scmp.ge.s32.totalorder %s22, 1
            %s27 = sphi %s0, %s0
            %s28 = sphi [#allocation2], [#allocation2]
          $region20: #{tpu_custom_call.1} parent=16 // loop_header_branch
            %25 = sbr.rel (%p23) target = $region24
          $region21: #{tpu_custom_call.1} parent=16 // loop_body
            %v29 = vld [vmem:[%s27] sm:%s20]
            %30 = vst [vmem:[%s28] sm:%s20] %v29
            %v31 = vld [vmem:[%s27 + $0x10] sm:%s20]
            %32 = vst [vmem:[%s28 + $0x8] sm:%s20] %v31
            %v33 = vld [vmem:[%s27 + $0x20] sm:%s20]
            %34 = vst [vmem:[%s28 + $0x10] sm:%s20] %v33
            %v35 = vld [vmem:[%s27 + $0x30] sm:%s20]
            %36 = vst [vmem:[%s28 + $0x18] sm:%s20] %v35
            %v37 = vld [vmem:[%s27 + $0x40] sm:%s20]
            %38 = vst [vmem:[%s28 + $0x20] sm:%s20] %v37
            %v39 = vld [vmem:[%s27 + $0x50] sm:%s20]
            %40 = vst [vmem:[%s28 + $0x28] sm:%s20] %v39
            %v41 = vld [vmem:[%s27 + $0x60] sm:%s20]
            %42 = vst [vmem:[%s28 + $0x30] sm:%s20] %v41
            %v43 = vld [vmem:[%s27 + $0x70] sm:%s20]
            %44 = vst [vmem:[%s28 + $0x38] sm:%s20] %v43
            %v45 = vld [vmem:[%s27 + $0x80] sm:%s20]
            %46 = vst [vmem:[%s28 + $0x40] sm:%s20] %v45
            %v47 = vld [vmem:[%s27 + $0x90] sm:%s20]
            %48 = vst [vmem:[%s28 + $0x48] sm:%s20] %v47
            %v49 = vld [vmem:[%s27 + $0xa0] sm:%s20]
            %50 = vst [vmem:[%s28 + $0x50] sm:%s20] %v49
            %v51 = vld [vmem:[%s27 + $0xb0] sm:%s20]
            %52 = vst [vmem:[%s28 + $0x58] sm:%s20] %v51
            %v53 = vld [vmem:[%s27 + $0xc0] sm:%s20]
            %54 = vst [vmem:[%s28 + $0x60] sm:%s20] %v53
            %v55 = vld [vmem:[%s27 + $0xd0] sm:%s20]
            %56 = vst [vmem:[%s28 + $0x68] sm:%s20] %v55
            %v57 = vld [vmem:[%s27 + $0xe0] sm:%s20]
            %58 = vst [vmem:[%s28 + $0x70] sm:%s20] %v57
            %v59 = vld [vmem:[%s27 + $0xf0] sm:%s20]
            %60 = vst [vmem:[%s28 + $0x78] sm:%s20] %v59
          $region22: #{tpu_custom_call.1} parent=16 // loop_footer
            %s26 = sadd.s32 1, %s22
          $region23: #{tpu_custom_call.1} parent=16 // loop_footer_branch
            %21 = sbr.rel target = $region19
          $region24: #{tpu_custom_call.1} parent=16 // loop_exit
            _
        $region17: #{tpu_custom_call.1} parent=8 // pred_fallthru
          _
      $region9: #{tpu_custom_call.1} parent=4 // pred_fallthru
        _
      %105 = vnop
    $region5: #{tpu_custom_call.1} parent=1 // pred_fallthru
      _
    // Predicated region
    $region40: #{tpu_custom_call.1} parent=1 // pred_check
      _
    $region41: #{tpu_custom_call.1} parent=1 // pred_check_branch
      %107 = sbr.rel (0) target = $region43
    $region42: #{tpu_custom_call.1} parent=1 // pred_region
      %s108 = scalar_lea.vmem %s1, 8
      // Predicated region
      $region44: #{tpu_custom_call.1} parent=42 // pred_check
        _
      $region45: #{tpu_custom_call.1} parent=42 // pred_check_branch
        %110 = sbr.rel (0) target = $region47
      $region46: #{tpu_custom_call.1} parent=42 // pred_region
        // Predicated region
        $region48: #{tpu_custom_call.1} parent=46 // pred_check
          _
        $region49: #{tpu_custom_call.1} parent=46 // pred_check_branch
          %112 = sbr.rel (0) target = $region51
        $region50: #{tpu_custom_call.1} parent=46 // pred_region
          // Predicated region
          $region63: #{tpu_custom_call.1} parent=50 // pred_check
            _
          $region64: #{tpu_custom_call.1} parent=50 // pred_check_branch
            %158 = sbr.rel (0) target = $region66
          $region65: #{tpu_custom_call.1} parent=50 // pred_region
            loop: start=0, step=1, limit=1
            $region67: #{tpu_custom_call.1} parent=65 // loop_pre_header
              _
            $region68: #{tpu_custom_call.1} parent=65 // loop_header
              %s160 = sphi 0, %s164
              %p161 = scmp.ge.s32.totalorder %s160, 1
              %s165 = sphi %s108, %s108
              %s166 = sphi [#allocation3], [#allocation3]
            $region69: #{tpu_custom_call.1} parent=65 // loop_header_branch
              %163 = sbr.rel (%p161) target = $region73
            $region70: #{tpu_custom_call.1} parent=65 // loop_body
              %v167 = vld [vmem:[%s165] sm:$0xff]
              %168 = vst [vmem:[%s166] sm:$0xff] %v167
              %v169 = vld [vmem:[%s165 + $0x10] sm:$0xff]
              %170 = vst [vmem:[%s166 + $0x8] sm:$0xff] %v169
              %v171 = vld [vmem:[%s165 + $0x20] sm:$0xff]
              %172 = vst [vmem:[%s166 + $0x10] sm:$0xff] %v171
              %v173 = vld [vmem:[%s165 + $0x30] sm:$0xff]
              %174 = vst [vmem:[%s166 + $0x18] sm:$0xff] %v173
              %v175 = vld [vmem:[%s165 + $0x40] sm:$0xff]
              %176 = vst [vmem:[%s166 + $0x20] sm:$0xff] %v175
              %v177 = vld [vmem:[%s165 + $0x50] sm:$0xff]
              %178 = vst [vmem:[%s166 + $0x28] sm:$0xff] %v177
              %v179 = vld [vmem:[%s165 + $0x60] sm:$0xff]
              %180 = vst [vmem:[%s166 + $0x30] sm:$0xff] %v179
              %v181 = vld [vmem:[%s165 + $0x70] sm:$0xff]
              %182 = vst [vmem:[%s166 + $0x38] sm:$0xff] %v181
              %v183 = vld [vmem:[%s165 + $0x80] sm:$0xff]
              %184 = vst [vmem:[%s166 + $0x40] sm:$0xff] %v183
              %v185 = vld [vmem:[%s165 + $0x90] sm:$0xff]
              %186 = vst [vmem:[%s166 + $0x48] sm:$0xff] %v185
              %v187 = vld [vmem:[%s165 + $0xa0] sm:$0xff]
              %188 = vst [vmem:[%s166 + $0x50] sm:$0xff] %v187
              %v189 = vld [vmem:[%s165 + $0xb0] sm:$0xff]
              %190 = vst [vmem:[%s166 + $0x58] sm:$0xff] %v189
              %v191 = vld [vmem:[%s165 + $0xc0] sm:$0xff]
              %192 = vst [vmem:[%s166 + $0x60] sm:$0xff] %v191
              %v193 = vld [vmem:[%s165 + $0xd0] sm:$0xff]
              %194 = vst [vmem:[%s166 + $0x68] sm:$0xff] %v193
              %v195 = vld [vmem:[%s165 + $0xe0] sm:$0xff]
              %196 = vst [vmem:[%s166 + $0x70] sm:$0xff] %v195
              %v197 = vld [vmem:[%s165 + $0xf0] sm:$0xff]
              %198 = vst [vmem:[%s166 + $0x78] sm:$0xff] %v197
            $region71: #{tpu_custom_call.1} parent=65 // loop_footer
              %s164 = sadd.s32 1, %s160
            $region72: #{tpu_custom_call.1} parent=65 // loop_footer_branch
              %159 = sbr.rel target = $region68
            $region73: #{tpu_custom_call.1} parent=65 // loop_exit
              _
          $region66: #{tpu_custom_call.1} parent=50 // pred_fallthru
            _
          // Predicated region
          $region74: #{tpu_custom_call.1} parent=50 // pred_check
            _
          $region75: #{tpu_custom_call.1} parent=50 // pred_check_branch
            %200 = sbr.rel target = $region77
          $region76: #{tpu_custom_call.1} parent=50 // pred_region
            _
          $region77: #{tpu_custom_call.1} parent=50 // pred_fallthru
            _
        $region51: #{tpu_custom_call.1} parent=46 // pred_fallthru
          _
        // Predicated region
        $region52: #{tpu_custom_call.1} parent=46 // pred_check
          _
        $region53: #{tpu_custom_call.1} parent=46 // pred_check_branch
          %114 = sbr.rel target = $region55
        $region54: #{tpu_custom_call.1} parent=46 // pred_region
          %s116 = ssub.s32 256, 1
          loop: start=0, step=1, limit=1
          $region56: #{tpu_custom_call.1} parent=54 // loop_pre_header
            _
          $region57: #{tpu_custom_call.1} parent=54 // loop_header
            %s118 = sphi 0, %s122
            %p119 = scmp.ge.s32.totalorder %s118, 1
            %s123 = sphi %s108, %s108
            %s124 = sphi [#allocation3], [#allocation3]
          $region58: #{tpu_custom_call.1} parent=54 // loop_header_branch
            %121 = sbr.rel (%p119) target = $region62
          $region59: #{tpu_custom_call.1} parent=54 // loop_body
            %v125 = vld [vmem:[%s123] sm:%s116]
            %126 = vst [vmem:[%s124] sm:%s116] %v125
            %v127 = vld [vmem:[%s123 + $0x10] sm:%s116]
            %128 = vst [vmem:[%s124 + $0x8] sm:%s116] %v127
            %v129 = vld [vmem:[%s123 + $0x20] sm:%s116]
            %130 = vst [vmem:[%s124 + $0x10] sm:%s116] %v129
            %v131 = vld [vmem:[%s123 + $0x30] sm:%s116]
            %132 = vst [vmem:[%s124 + $0x18] sm:%s116] %v131
            %v133 = vld [vmem:[%s123 + $0x40] sm:%s116]
            %134 = vst [vmem:[%s124 + $0x20] sm:%s116] %v133
            %v135 = vld [vmem:[%s123 + $0x50] sm:%s116]
            %136 = vst [vmem:[%s124 + $0x28] sm:%s116] %v135
            %v137 = vld [vmem:[%s123 + $0x60] sm:%s116]
            %138 = vst [vmem:[%s124 + $0x30] sm:%s116] %v137
            %v139 = vld [vmem:[%s123 + $0x70] sm:%s116]
            %140 = vst [vmem:[%s124 + $0x38] sm:%s116] %v139
            %v141 = vld [vmem:[%s123 + $0x80] sm:%s116]
            %142 = vst [vmem:[%s124 + $0x40] sm:%s116] %v141
            %v143 = vld [vmem:[%s123 + $0x90] sm:%s116]
            %144 = vst [vmem:[%s124 + $0x48] sm:%s116] %v143
            %v145 = vld [vmem:[%s123 + $0xa0] sm:%s116]
            %146 = vst [vmem:[%s124 + $0x50] sm:%s116] %v145
            %v147 = vld [vmem:[%s123 + $0xb0] sm:%s116]
            %148 = vst [vmem:[%s124 + $0x58] sm:%s116] %v147
            %v149 = vld [vmem:[%s123 + $0xc0] sm:%s116]
            %150 = vst [vmem:[%s124 + $0x60] sm:%s116] %v149
            %v151 = vld [vmem:[%s123 + $0xd0] sm:%s116]
            %152 = vst [vmem:[%s124 + $0x68] sm:%s116] %v151
            %v153 = vld [vmem:[%s123 + $0xe0] sm:%s116]
            %154 = vst [vmem:[%s124 + $0x70] sm:%s116] %v153
            %v155 = vld [vmem:[%s123 + $0xf0] sm:%s116]
            %156 = vst [vmem:[%s124 + $0x78] sm:%s116] %v155
          $region60: #{tpu_custom_call.1} parent=54 // loop_footer
            %s122 = sadd.s32 1, %s118
          $region61: #{tpu_custom_call.1} parent=54 // loop_footer_branch
            %117 = sbr.rel target = $region57
          $region62: #{tpu_custom_call.1} parent=54 // loop_exit
            _
        $region55: #{tpu_custom_call.1} parent=46 // pred_fallthru
          _
      $region47: #{tpu_custom_call.1} parent=42 // pred_fallthru
        _
      %201 = vnop
    $region43: #{tpu_custom_call.1} parent=1 // pred_fallthru
      _
    // Predicated region
    $region78: #{tpu_custom_call.1} parent=1 // pred_check
      _
    $region79: #{tpu_custom_call.1} parent=1 // pred_check_branch
      %203 = sbr.rel (0) target = $region81
    $region80: #{tpu_custom_call.1} parent=1 // pred_region
      _
    $region81: #{tpu_custom_call.1} parent=1 // pred_fallthru
      _
    // Predicated region
    $region82: #{tpu_custom_call.1} parent=1 // pred_check
      _
    $region83: #{tpu_custom_call.1} parent=1 // pred_check_branch
      %205 = sbr.rel (0) target = $region85
    $region84: #{tpu_custom_call.1} parent=1 // pred_region
      _
    $region85: #{tpu_custom_call.1} parent=1 // pred_fallthru
      _
    // Predicated region
    $region86: #{tpu_custom_call.1} parent=1 // pred_check
      _
    $region87: #{tpu_custom_call.1} parent=1 // pred_check_branch
      %207 = sbr.rel (0) target = $region89
    $region88: #{tpu_custom_call.1} parent=1 // pred_region
      _
    $region89: #{tpu_custom_call.1} parent=1 // pred_fallthru
      _
    // Predicated region
    $region90: #{tpu_custom_call.1} parent=1 // pred_check
      _
    $region91: #{tpu_custom_call.1} parent=1 // pred_check_branch
      %209 = sbr.rel (0) target = $region93
    $region92: #{tpu_custom_call.1} parent=1 // pred_region
      _
    $region93: #{tpu_custom_call.1} parent=1 // pred_fallthru
      _
    // Predicated region
    $region94: #{tpu_custom_call.1} parent=1 // pred_check
      _
    $region95: #{tpu_custom_call.1} parent=1 // pred_check_branch
      %211 = sbr.rel (0) target = $region97
    $region96: #{tpu_custom_call.1} parent=1 // pred_region
      _
    $region97: #{tpu_custom_call.1} parent=1 // pred_fallthru
      _
    // Predicated region
    $region98: #{tpu_custom_call.1} parent=1 // pred_check
      _
    $region99: #{tpu_custom_call.1} parent=1 // pred_check_branch
      %213 = sbr.rel (0) target = $region101
    $region100: #{tpu_custom_call.1} parent=1 // pred_region
      _
    $region101: #{tpu_custom_call.1} parent=1 // pred_fallthru
      _
    %v215 = vld [vmem:[#allocation2] sm:$0xff]
    %v216 = vld [vmem:[#allocation2 + $0x8] sm:$0xff]
    %v217 = vld [vmem:[#allocation2 + $0x10] sm:$0xff]
    %v218 = vld [vmem:[#allocation2 + $0x18] sm:$0xff]
    %v219 = vld [vmem:[#allocation2 + $0x20] sm:$0xff]
    %v220 = vld [vmem:[#allocation2 + $0x28] sm:$0xff]
    %v221 = vld [vmem:[#allocation2 + $0x30] sm:$0xff]
    %v222 = vld [vmem:[#allocation2 + $0x38] sm:$0xff]
    %v223 = vld [vmem:[#allocation2 + $0x40] sm:$0xff]
    %v224 = vld [vmem:[#allocation2 + $0x48] sm:$0xff]
    %v225 = vld [vmem:[#allocation2 + $0x50] sm:$0xff]
    %v226 = vld [vmem:[#allocation2 + $0x58] sm:$0xff]
    %v227 = vld [vmem:[#allocation2 + $0x60] sm:$0xff]
    %v228 = vld [vmem:[#allocation2 + $0x68] sm:$0xff]
    %v229 = vld [vmem:[#allocation2 + $0x70] sm:$0xff]
    %v230 = vld [vmem:[#allocation2 + $0x78] sm:$0xff]
    %v231 = vld [vmem:[#allocation3] sm:$0xff]
    %v232 = vld [vmem:[#allocation3 + $0x8] sm:$0xff]
    %v233 = vld [vmem:[#allocation3 + $0x10] sm:$0xff]
    %v234 = vld [vmem:[#allocation3 + $0x18] sm:$0xff]
    %v235 = vld [vmem:[#allocation3 + $0x20] sm:$0xff]
    %v236 = vld [vmem:[#allocation3 + $0x28] sm:$0xff]
    %v237 = vld [vmem:[#allocation3 + $0x30] sm:$0xff]
    %v238 = vld [vmem:[#allocation3 + $0x38] sm:$0xff]
    %v239 = vld [vmem:[#allocation3 + $0x40] sm:$0xff]
    %v240 = vld [vmem:[#allocation3 + $0x48] sm:$0xff]
    %v241 = vld [vmem:[#allocation3 + $0x50] sm:$0xff]
    %v242 = vld [vmem:[#allocation3 + $0x58] sm:$0xff]
    %v243 = vld [vmem:[#allocation3 + $0x60] sm:$0xff]
    %v244 = vld [vmem:[#allocation3 + $0x68] sm:$0xff]
    %v245 = vld [vmem:[#allocation3 + $0x70] sm:$0xff]
    %v246 = vld [vmem:[#allocation3 + $0x78] sm:$0xff]
    %vm247 = vcmask 64512
    %v248 = vsel %vm247, %v215, 0.0
    %249 = vadd.xlane.f32.xlu0 %v248
    %v250 = vpop.xlane.xlu0 %249
    %v251 = vsel %vm247, %v216, 0.0
    %252 = vadd.xlane.f32.xlu0 %v251
    %v253 = vpop.xlane.xlu0 %252
    %v254 = vsel %vm247, %v217, 0.0
    %255 = vadd.xlane.f32.xlu0 %v254
    %v256 = vpop.xlane.xlu0 %255
    %v257 = vsel %vm247, %v218, 0.0
    %258 = vadd.xlane.f32.xlu0 %v257
    %v259 = vpop.xlane.xlu0 %258
    %v260 = vsel %vm247, %v219, 0.0
    %261 = vadd.xlane.f32.xlu0 %v260
    %v262 = vpop.xlane.xlu0 %261
    %v263 = vsel %vm247, %v220, 0.0
    %264 = vadd.xlane.f32.xlu0 %v263
    %v265 = vpop.xlane.xlu0 %264
    %v266 = vsel %vm247, %v221, 0.0
    %267 = vadd.xlane.f32.xlu0 %v266
    %v268 = vpop.xlane.xlu0 %267
    %v269 = vsel %vm247, %v222, 0.0
    %270 = vadd.xlane.f32.xlu0 %v269
    %v271 = vpop.xlane.xlu0 %270
    %v272 = vsel %vm247, %v223, 0.0
    %273 = vadd.xlane.f32.xlu0 %v272
    %v274 = vpop.xlane.xlu0 %273
    %v275 = vsel %vm247, %v224, 0.0
    %276 = vadd.xlane.f32.xlu0 %v275
    %v277 = vpop.xlane.xlu0 %276
    %v278 = vsel %vm247, %v225, 0.0
    %279 = vadd.xlane.f32.xlu0 %v278
    %v280 = vpop.xlane.xlu0 %279
    %v281 = vsel %vm247, %v226, 0.0
    %282 = vadd.xlane.f32.xlu0 %v281
    %v283 = vpop.xlane.xlu0 %282
    %v284 = vsel %vm247, %v227, 0.0
    %285 = vadd.xlane.f32.xlu0 %v284
    %v286 = vpop.xlane.xlu0 %285
    %v287 = vsel %vm247, %v228, 0.0
    %288 = vadd.xlane.f32.xlu0 %v287
    %v289 = vpop.xlane.xlu0 %288
    %v290 = vsel %vm247, %v229, 0.0
    %291 = vadd.xlane.f32.xlu0 %v290
    %v292 = vpop.xlane.xlu0 %291
    %v293 = vsel %vm247, %v230, 0.0
    %294 = vadd.xlane.f32.xlu0 %v293
    %v295 = vpop.xlane.xlu0 %294
    %v296 = vsel %vm247, %v231, 0.0
    %297 = vadd.xlane.f32.xlu0 %v296
    %v298 = vpop.xlane.xlu0 %297
    %v299 = vsel %vm247, %v232, 0.0
    %300 = vadd.xlane.f32.xlu0 %v299
    %v301 = vpop.xlane.xlu0 %300
    %v302 = vsel %vm247, %v233, 0.0
    %303 = vadd.xlane.f32.xlu0 %v302
    %v304 = vpop.xlane.xlu0 %303
    %v305 = vsel %vm247, %v234, 0.0
    %306 = vadd.xlane.f32.xlu0 %v305
    %v307 = vpop.xlane.xlu0 %306
    %v308 = vsel %vm247, %v235, 0.0
    %309 = vadd.xlane.f32.xlu0 %v308
    %v310 = vpop.xlane.xlu0 %309
    %v311 = vsel %vm247, %v236, 0.0
    %312 = vadd.xlane.f32.xlu0 %v311
    %v313 = vpop.xlane.xlu0 %312
    %v314 = vsel %vm247, %v237, 0.0
    %315 = vadd.xlane.f32.xlu0 %v314
    %v316 = vpop.xlane.xlu0 %315
    %v317 = vsel %vm247, %v238, 0.0
    %318 = vadd.xlane.f32.xlu0 %v317
    %v319 = vpop.xlane.xlu0 %318
    %v320 = vsel %vm247, %v239, 0.0
    %321 = vadd.xlane.f32.xlu0 %v320
    %v322 = vpop.xlane.xlu0 %321
    %v323 = vsel %vm247, %v240, 0.0
    %324 = vadd.xlane.f32.xlu0 %v323
    %v325 = vpop.xlane.xlu0 %324
    %v326 = vsel %vm247, %v241, 0.0
    %327 = vadd.xlane.f32.xlu0 %v326
    %v328 = vpop.xlane.xlu0 %327
    %v329 = vsel %vm247, %v242, 0.0
    %330 = vadd.xlane.f32.xlu0 %v329
    %v331 = vpop.xlane.xlu0 %330
    %v332 = vsel %vm247, %v243, 0.0
    %333 = vadd.xlane.f32.xlu0 %v332
    %v334 = vpop.xlane.xlu0 %333
    %v335 = vsel %vm247, %v244, 0.0
    %336 = vadd.xlane.f32.xlu0 %v335
    %v337 = vpop.xlane.xlu0 %336
    %v338 = vsel %vm247, %v245, 0.0
    %339 = vadd.xlane.f32.xlu0 %v338
    %v340 = vpop.xlane.xlu0 %339
    %v341 = vsel %vm247, %v246, 0.0
    %342 = vadd.xlane.f32.xlu0 %v341
    %v343 = vpop.xlane.xlu0 %342
    %v344 = vadd.f32 %v250, %v298
    %v345 = vadd.f32 %v253, %v301
    %v346 = vadd.f32 %v256, %v304
    %v347 = vadd.f32 %v259, %v307
    %v348 = vadd.f32 %v262, %v310
    %v349 = vadd.f32 %v265, %v313
    %v350 = vadd.f32 %v268, %v316
    %v351 = vadd.f32 %v271, %v319
    %v352 = vadd.f32 %v274, %v322
    %v353 = vadd.f32 %v277, %v325
    %v354 = vadd.f32 %v280, %v328
    %v355 = vadd.f32 %v283, %v331
    %v356 = vadd.f32 %v286, %v334
    %v357 = vadd.f32 %v289, %v337
    %v358 = vadd.f32 %v292, %v340
    %v359 = vadd.f32 %v295, %v343
    %v360 = vmul.f32 %v215, %v215
    %v361 = vmul.f32 %v216, %v216
    %v362 = vmul.f32 %v217, %v217
    %v363 = vmul.f32 %v218, %v218
    %v364 = vmul.f32 %v219, %v219
    %v365 = vmul.f32 %v220, %v220
    %v366 = vmul.f32 %v221, %v221
    %v367 = vmul.f32 %v222, %v222
    %v368 = vmul.f32 %v223, %v223
    %v369 = vmul.f32 %v224, %v224
    %v370 = vmul.f32 %v225, %v225
    %v371 = vmul.f32 %v226, %v226
    %v372 = vmul.f32 %v227, %v227
    %v373 = vmul.f32 %v228, %v228
    %v374 = vmul.f32 %v229, %v229
    %v375 = vmul.f32 %v230, %v230
    %v376 = vsel %vm247, %v360, 0.0
    %377 = vadd.xlane.f32.xlu0 %v376
    %v378 = vpop.xlane.xlu0 %377
    %v379 = vsel %vm247, %v361, 0.0
    %380 = vadd.xlane.f32.xlu0 %v379
    %v381 = vpop.xlane.xlu0 %380
    %v382 = vsel %vm247, %v362, 0.0
    %383 = vadd.xlane.f32.xlu0 %v382
    %v384 = vpop.xlane.xlu0 %383
    %v385 = vsel %vm247, %v363, 0.0
    %386 = vadd.xlane.f32.xlu0 %v385
    %v387 = vpop.xlane.xlu0 %386
    %v388 = vsel %vm247, %v364, 0.0
    %389 = vadd.xlane.f32.xlu0 %v388
    %v390 = vpop.xlane.xlu0 %389
    %v391 = vsel %vm247, %v365, 0.0
    %392 = vadd.xlane.f32.xlu0 %v391
    %v393 = vpop.xlane.xlu0 %392
    %v394 = vsel %vm247, %v366, 0.0
    %395 = vadd.xlane.f32.xlu0 %v394
    %v396 = vpop.xlane.xlu0 %395
    %v397 = vsel %vm247, %v367, 0.0
    %398 = vadd.xlane.f32.xlu0 %v397
    %v399 = vpop.xlane.xlu0 %398
    %v400 = vsel %vm247, %v368, 0.0
    %401 = vadd.xlane.f32.xlu0 %v400
    %v402 = vpop.xlane.xlu0 %401
    %v403 = vsel %vm247, %v369, 0.0
    %404 = vadd.xlane.f32.xlu0 %v403
    %v405 = vpop.xlane.xlu0 %404
    %v406 = vsel %vm247, %v370, 0.0
    %407 = vadd.xlane.f32.xlu0 %v406
    %v408 = vpop.xlane.xlu0 %407
    %v409 = vsel %vm247, %v371, 0.0
    %410 = vadd.xlane.f32.xlu0 %v409
    %v411 = vpop.xlane.xlu0 %410
    %v412 = vsel %vm247, %v372, 0.0
    %413 = vadd.xlane.f32.xlu0 %v412
    %v414 = vpop.xlane.xlu0 %413
    %v415 = vsel %vm247, %v373, 0.0
    %416 = vadd.xlane.f32.xlu0 %v415
    %v417 = vpop.xlane.xlu0 %416
    %v418 = vsel %vm247, %v374, 0.0
    %419 = vadd.xlane.f32.xlu0 %v418
    %v420 = vpop.xlane.xlu0 %419
    %v421 = vsel %vm247, %v375, 0.0
    %422 = vadd.xlane.f32.xlu0 %v421
    %v423 = vpop.xlane.xlu0 %422
    %v424 = vmul.f32 %v231, %v231
    %v425 = vmul.f32 %v232, %v232
    %v426 = vmul.f32 %v233, %v233
    %v427 = vmul.f32 %v234, %v234
    %v428 = vmul.f32 %v235, %v235
    %v429 = vmul.f32 %v236, %v236
    %v430 = vmul.f32 %v237, %v237
    %v431 = vmul.f32 %v238, %v238
    %v432 = vmul.f32 %v239, %v239
    %v433 = vmul.f32 %v240, %v240
    %v434 = vmul.f32 %v241, %v241
    %v435 = vmul.f32 %v242, %v242
    %v436 = vmul.f32 %v243, %v243
    %v437 = vmul.f32 %v244, %v244
    %v438 = vmul.f32 %v245, %v245
    %v439 = vmul.f32 %v246, %v246
    %v440 = vsel %vm247, %v424, 0.0
    %441 = vadd.xlane.f32.xlu0 %v440
    %v442 = vpop.xlane.xlu0 %441
    %v443 = vsel %vm247, %v425, 0.0
    %444 = vadd.xlane.f32.xlu0 %v443
    %v445 = vpop.xlane.xlu0 %444
    %v446 = vsel %vm247, %v426, 0.0
    %447 = vadd.xlane.f32.xlu0 %v446
    %v448 = vpop.xlane.xlu0 %447
    %v449 = vsel %vm247, %v427, 0.0
    %450 = vadd.xlane.f32.xlu0 %v449
    %v451 = vpop.xlane.xlu0 %450
    %v452 = vsel %vm247, %v428, 0.0
    %453 = vadd.xlane.f32.xlu0 %v452
    %v454 = vpop.xlane.xlu0 %453
    %v455 = vsel %vm247, %v429, 0.0
    %456 = vadd.xlane.f32.xlu0 %v455
    %v457 = vpop.xlane.xlu0 %456
    %v458 = vsel %vm247, %v430, 0.0
    %459 = vadd.xlane.f32.xlu0 %v458
    %v460 = vpop.xlane.xlu0 %459
    %v461 = vsel %vm247, %v431, 0.0
    %462 = vadd.xlane.f32.xlu0 %v461
    %v463 = vpop.xlane.xlu0 %462
    %v464 = vsel %vm247, %v432, 0.0
    %465 = vadd.xlane.f32.xlu0 %v464
    %v466 = vpop.xlane.xlu0 %465
    %v467 = vsel %vm247, %v433, 0.0
    %468 = vadd.xlane.f32.xlu0 %v467
    %v469 = vpop.xlane.xlu0 %468
    %v470 = vsel %vm247, %v434, 0.0
    %471 = vadd.xlane.f32.xlu0 %v470
    %v472 = vpop.xlane.xlu0 %471
    %v473 = vsel %vm247, %v435, 0.0
    %474 = vadd.xlane.f32.xlu0 %v473
    %v475 = vpop.xlane.xlu0 %474
    %v476 = vsel %vm247, %v436, 0.0
    %477 = vadd.xlane.f32.xlu0 %v476
    %v478 = vpop.xlane.xlu0 %477
    %v479 = vsel %vm247, %v437, 0.0
    %480 = vadd.xlane.f32.xlu0 %v479
    %v481 = vpop.xlane.xlu0 %480
    %v482 = vsel %vm247, %v438, 0.0
    %483 = vadd.xlane.f32.xlu0 %v482
    %v484 = vpop.xlane.xlu0 %483
    %v485 = vsel %vm247, %v439, 0.0
    %486 = vadd.xlane.f32.xlu0 %v485
    %v487 = vpop.xlane.xlu0 %486
    %v488 = vadd.f32 %v378, %v442
    %v489 = vadd.f32 %v381, %v445
    %v490 = vadd.f32 %v384, %v448
    %v491 = vadd.f32 %v387, %v451
    %v492 = vadd.f32 %v390, %v454
    %v493 = vadd.f32 %v393, %v457
    %v494 = vadd.f32 %v396, %v460
    %v495 = vadd.f32 %v399, %v463
    %v496 = vadd.f32 %v402, %v466
    %v497 = vadd.f32 %v405, %v469
    %v498 = vadd.f32 %v408, %v472
    %v499 = vadd.f32 %v411, %v475
    %v500 = vadd.f32 %v414, %v478
    %v501 = vadd.f32 %v417, %v481
    %v502 = vadd.f32 %v420, %v484
    %v503 = vadd.f32 %v423, %v487
    %v504 = vmul.f32 %v344, 0.0625
    %v505 = vmul.f32 %v345, 0.0625
    %v506 = vmul.f32 %v346, 0.0625
    %v507 = vmul.f32 %v347, 0.0625
    %v508 = vmul.f32 %v348, 0.0625
    %v509 = vmul.f32 %v349, 0.0625
    %v510 = vmul.f32 %v350, 0.0625
    %v511 = vmul.f32 %v351, 0.0625
    %v512 = vmul.f32 %v352, 0.0625
    %v513 = vmul.f32 %v353, 0.0625
    %v514 = vmul.f32 %v354, 0.0625
    %v515 = vmul.f32 %v355, 0.0625
    %v516 = vmul.f32 %v356, 0.0625
    %v517 = vmul.f32 %v357, 0.0625
    %v518 = vmul.f32 %v358, 0.0625
    %v519 = vmul.f32 %v359, 0.0625
    %v520 = vmul.f32 %v488, 0.0625
    %v521 = vmul.f32 %v489, 0.0625
    %v522 = vmul.f32 %v490, 0.0625
    %v523 = vmul.f32 %v491, 0.0625
    %v524 = vmul.f32 %v492, 0.0625
    %v525 = vmul.f32 %v493, 0.0625
    %v526 = vmul.f32 %v494, 0.0625
    %v527 = vmul.f32 %v495, 0.0625
    %v528 = vmul.f32 %v496, 0.0625
    %v529 = vmul.f32 %v497, 0.0625
    %v530 = vmul.f32 %v498, 0.0625
    %v531 = vmul.f32 %v499, 0.0625
    %v532 = vmul.f32 %v500, 0.0625
    %v533 = vmul.f32 %v501, 0.0625
    %v534 = vmul.f32 %v502, 0.0625
    %v535 = vmul.f32 %v503, 0.0625
    %v536 = vmul.f32 %v504, %v504
    %v537 = vmul.f32 %v505, %v505
    %v538 = vmul.f32 %v506, %v506
    %v539 = vmul.f32 %v507, %v507
    %v540 = vmul.f32 %v508, %v508
    %v541 = vmul.f32 %v509, %v509
    %v542 = vmul.f32 %v510, %v510
    %v543 = vmul.f32 %v511, %v511
    %v544 = vmul.f32 %v512, %v512
    %v545 = vmul.f32 %v513, %v513
    %v546 = vmul.f32 %v514, %v514
    %v547 = vmul.f32 %v515, %v515
    %v548 = vmul.f32 %v516, %v516
    %v549 = vmul.f32 %v517, %v517
    %v550 = vmul.f32 %v518, %v518
    %v551 = vmul.f32 %v519, %v519
    %v552 = vsub.f32 %v520, %v536
    %v553 = vsub.f32 %v521, %v537
    %v554 = vsub.f32 %v522, %v538
    %v555 = vsub.f32 %v523, %v539
    %v556 = vsub.f32 %v524, %v540
    %v557 = vsub.f32 %v525, %v541
    %v558 = vsub.f32 %v526, %v542
    %v559 = vsub.f32 %v527, %v543
    %v560 = vsub.f32 %v528, %v544
    %v561 = vsub.f32 %v529, %v545
    %v562 = vsub.f32 %v530, %v546
    %v563 = vsub.f32 %v531, %v547
    %v564 = vsub.f32 %v532, %v548
    %v565 = vsub.f32 %v533, %v549
    %v566 = vsub.f32 %v534, %v550
    %v567 = vsub.f32 %v535, %v551
    %v568 = vmax.f32 %v552, 0.0
    %v569 = vmax.f32 %v553, 0.0
    %v570 = vmax.f32 %v554, 0.0
    %v571 = vmax.f32 %v555, 0.0
    %v572 = vmax.f32 %v556, 0.0
    %v573 = vmax.f32 %v557, 0.0
    %v574 = vmax.f32 %v558, 0.0
    %v575 = vmax.f32 %v559, 0.0
    %v576 = vmax.f32 %v560, 0.0
    %v577 = vmax.f32 %v561, 0.0
    %v578 = vmax.f32 %v562, 0.0
    %v579 = vmax.f32 %v563, 0.0
    %v580 = vmax.f32 %v564, 0.0
    %v581 = vmax.f32 %v565, 0.0
    %v582 = vmax.f32 %v566, 0.0
    %v583 = vmax.f32 %v567, 0.0
    %v584 = vadd.f32 %v568, 1e-05
    %v585 = vadd.f32 %v569, 1e-05
    %v586 = vadd.f32 %v570, 1e-05
    %v587 = vadd.f32 %v571, 1e-05
    %v588 = vadd.f32 %v572, 1e-05
    %v589 = vadd.f32 %v573, 1e-05
    %v590 = vadd.f32 %v574, 1e-05
    %v591 = vadd.f32 %v575, 1e-05
    %v592 = vadd.f32 %v576, 1e-05
    %v593 = vadd.f32 %v577, 1e-05
    %v594 = vadd.f32 %v578, 1e-05
    %v595 = vadd.f32 %v579, 1e-05
    %v596 = vadd.f32 %v580, 1e-05
    %v597 = vadd.f32 %v581, 1e-05
    %v598 = vadd.f32 %v582, 1e-05
    %v599 = vadd.f32 %v583, 1e-05
    %v600 = vrsqrt.pop %v584
    %v601 = vmul.f32 %v600, %v584
    %v602 = vmul.f32 %v601, %v600
    %v603 = vmul.f32 0.5, %v602
    %v604 = vsub.f32 1.5, %v603
    %v605 = vmul.f32 %v600, %v604
    %vm606 = vweird.f32 %v584
    %vm607 = vweird.f32 %v600
    %vm608 = vmor %vm606, %vm607
    %v609 = vsel %vm608, %v600, %v605
    %v610 = vrsqrt.pop %v585
    %v611 = vmul.f32 %v610, %v585
    %v612 = vmul.f32 %v611, %v610
    %v613 = vmul.f32 0.5, %v612
    %v614 = vsub.f32 1.5, %v613
    %v615 = vmul.f32 %v610, %v614
    %vm616 = vweird.f32 %v585
    %vm617 = vweird.f32 %v610
    %vm618 = vmor %vm616, %vm617
    %v619 = vsel %vm618, %v610, %v615
    %v620 = vrsqrt.pop %v586
    %v621 = vmul.f32 %v620, %v586
    %v622 = vmul.f32 %v621, %v620
    %v623 = vmul.f32 0.5, %v622
    %v624 = vsub.f32 1.5, %v623
    %v625 = vmul.f32 %v620, %v624
    %vm626 = vweird.f32 %v586
    %vm627 = vweird.f32 %v620
    %vm628 = vmor %vm626, %vm627
    %v629 = vsel %vm628, %v620, %v625
    %v630 = vrsqrt.pop %v587
    %v631 = vmul.f32 %v630, %v587
    %v632 = vmul.f32 %v631, %v630
    %v633 = vmul.f32 0.5, %v632
    %v634 = vsub.f32 1.5, %v633
    %v635 = vmul.f32 %v630, %v634
    %vm636 = vweird.f32 %v587
    %vm637 = vweird.f32 %v630
    %vm638 = vmor %vm636, %vm637
    %v639 = vsel %vm638, %v630, %v635
    %v640 = vrsqrt.pop %v588
    %v641 = vmul.f32 %v640, %v588
    %v642 = vmul.f32 %v641, %v640
    %v643 = vmul.f32 0.5, %v642
    %v644 = vsub.f32 1.5, %v643
    %v645 = vmul.f32 %v640, %v644
    %vm646 = vweird.f32 %v588
    %vm647 = vweird.f32 %v640
    %vm648 = vmor %vm646, %vm647
    %v649 = vsel %vm648, %v640, %v645
    %v650 = vrsqrt.pop %v589
    %v651 = vmul.f32 %v650, %v589
    %v652 = vmul.f32 %v651, %v650
    %v653 = vmul.f32 0.5, %v652
    %v654 = vsub.f32 1.5, %v653
    %v655 = vmul.f32 %v650, %v654
    %vm656 = vweird.f32 %v589
    %vm657 = vweird.f32 %v650
    %vm658 = vmor %vm656, %vm657
    %v659 = vsel %vm658, %v650, %v655
    %v660 = vrsqrt.pop %v590
    %v661 = vmul.f32 %v660, %v590
    %v662 = vmul.f32 %v661, %v660
    %v663 = vmul.f32 0.5, %v662
    %v664 = vsub.f32 1.5, %v663
    %v665 = vmul.f32 %v660, %v664
    %vm666 = vweird.f32 %v590
    %vm667 = vweird.f32 %v660
    %vm668 = vmor %vm666, %vm667
    %v669 = vsel %vm668, %v660, %v665
    %v670 = vrsqrt.pop %v591
    %v671 = vmul.f32 %v670, %v591
    %v672 = vmul.f32 %v671, %v670
    %v673 = vmul.f32 0.5, %v672
    %v674 = vsub.f32 1.5, %v673
    %v675 = vmul.f32 %v670, %v674
    %vm676 = vweird.f32 %v591
    %vm677 = vweird.f32 %v670
    %vm678 = vmor %vm676, %vm677
    %v679 = vsel %vm678, %v670, %v675
    %v680 = vrsqrt.pop %v592
    %v681 = vmul.f32 %v680, %v592
    %v682 = vmul.f32 %v681, %v680
    %v683 = vmul.f32 0.5, %v682
    %v684 = vsub.f32 1.5, %v683
    %v685 = vmul.f32 %v680, %v684
    %vm686 = vweird.f32 %v592
    %vm687 = vweird.f32 %v680
    %vm688 = vmor %vm686, %vm687
    %v689 = vsel %vm688, %v680, %v685
    %v690 = vrsqrt.pop %v593
    %v691 = vmul.f32 %v690, %v593
    %v692 = vmul.f32 %v691, %v690
    %v693 = vmul.f32 0.5, %v692
    %v694 = vsub.f32 1.5, %v693
    %v695 = vmul.f32 %v690, %v694
    %vm696 = vweird.f32 %v593
    %vm697 = vweird.f32 %v690
    %vm698 = vmor %vm696, %vm697
    %v699 = vsel %vm698, %v690, %v695
    %v700 = vrsqrt.pop %v594
    %v701 = vmul.f32 %v700, %v594
    %v702 = vmul.f32 %v701, %v700
    %v703 = vmul.f32 0.5, %v702
    %v704 = vsub.f32 1.5, %v703
    %v705 = vmul.f32 %v700, %v704
    %vm706 = vweird.f32 %v594
    %vm707 = vweird.f32 %v700
    %vm708 = vmor %vm706, %vm707
    %v709 = vsel %vm708, %v700, %v705
    %v710 = vrsqrt.pop %v595
    %v711 = vmul.f32 %v710, %v595
    %v712 = vmul.f32 %v711, %v710
    %v713 = vmul.f32 0.5, %v712
    %v714 = vsub.f32 1.5, %v713
    %v715 = vmul.f32 %v710, %v714
    %vm716 = vweird.f32 %v595
    %vm717 = vweird.f32 %v710
    %vm718 = vmor %vm716, %vm717
    %v719 = vsel %vm718, %v710, %v715
    %v720 = vrsqrt.pop %v596
    %v721 = vmul.f32 %v720, %v596
    %v722 = vmul.f32 %v721, %v720
    %v723 = vmul.f32 0.5, %v722
    %v724 = vsub.f32 1.5, %v723
    %v725 = vmul.f32 %v720, %v724
    %vm726 = vweird.f32 %v596
    %vm727 = vweird.f32 %v720
    %vm728 = vmor %vm726, %vm727
    %v729 = vsel %vm728, %v720, %v725
    %v730 = vrsqrt.pop %v597
    %v731 = vmul.f32 %v730, %v597
    %v732 = vmul.f32 %v731, %v730
    %v733 = vmul.f32 0.5, %v732
    %v734 = vsub.f32 1.5, %v733
    %v735 = vmul.f32 %v730, %v734
    %vm736 = vweird.f32 %v597
    %vm737 = vweird.f32 %v730
    %vm738 = vmor %vm736, %vm737
    %v739 = vsel %vm738, %v730, %v735
    %v740 = vrsqrt.pop %v598
    %v741 = vmul.f32 %v740, %v598
    %v742 = vmul.f32 %v741, %v740
    %v743 = vmul.f32 0.5, %v742
    %v744 = vsub.f32 1.5, %v743
    %v745 = vmul.f32 %v740, %v744
    %vm746 = vweird.f32 %v598
    %vm747 = vweird.f32 %v740
    %vm748 = vmor %vm746, %vm747
    %v749 = vsel %vm748, %v740, %v745
    %v750 = vrsqrt.pop %v599
    %v751 = vmul.f32 %v750, %v599
    %v752 = vmul.f32 %v751, %v750
    %v753 = vmul.f32 0.5, %v752
    %v754 = vsub.f32 1.5, %v753
    %v755 = vmul.f32 %v750, %v754
    %vm756 = vweird.f32 %v599
    %vm757 = vweird.f32 %v750
    %vm758 = vmor %vm756, %vm757
    %v759 = vsel %vm758, %v750, %v755
    %v760 = vpack.c.bf16 %v215, %v215
    %v761 = vpack.c.bf16 %v216, %v216
    %v762 = vpack.c.bf16 %v217, %v217
    %v763 = vpack.c.bf16 %v218, %v218
    %v764 = vpack.c.bf16 %v219, %v219
    %v765 = vpack.c.bf16 %v220, %v220
    %v766 = vpack.c.bf16 %v221, %v221
    %v767 = vpack.c.bf16 %v222, %v222
    %v768 = vpack.c.bf16 %v223, %v223
    %v769 = vpack.c.bf16 %v224, %v224
    %v770 = vpack.c.bf16 %v225, %v225
    %v771 = vpack.c.bf16 %v226, %v226
    %v772 = vpack.c.bf16 %v227, %v227
    %v773 = vpack.c.bf16 %v228, %v228
    %v774 = vpack.c.bf16 %v229, %v229
    %v775 = vpack.c.bf16 %v230, %v230
    %v776 = vpack.c.bf16 %v231, %v231
    %v777 = vpack.c.bf16 %v232, %v232
    %v778 = vpack.c.bf16 %v233, %v233
    %v779 = vpack.c.bf16 %v234, %v234
    %v780 = vpack.c.bf16 %v235, %v235
    %v781 = vpack.c.bf16 %v236, %v236
    %v782 = vpack.c.bf16 %v237, %v237
    %v783 = vpack.c.bf16 %v238, %v238
    %v784 = vpack.c.bf16 %v239, %v239
    %v785 = vpack.c.bf16 %v240, %v240
    %v786 = vpack.c.bf16 %v241, %v241
    %v787 = vpack.c.bf16 %v242, %v242
    %v788 = vpack.c.bf16 %v243, %v243
    %v789 = vpack.c.bf16 %v244, %v244
    %v790 = vpack.c.bf16 %v245, %v245
    %v791 = vpack.c.bf16 %v246, %v246
    %v792 = vld [vmem:[%s2] sm:$0xf]
    %v793 = vld [vmem:[%s3] sm:$0xf]
    %v810 = vunpack.c.l.b16 %v776
    %v811 = vunpack.c.l.b16 %v777
    %v812 = vunpack.c.l.b16 %v778
    %v813 = vunpack.c.l.b16 %v779
    %v814 = vunpack.c.l.b16 %v780
    %v815 = vunpack.c.l.b16 %v781
    %v816 = vunpack.c.l.b16 %v782
    %v817 = vunpack.c.l.b16 %v783
    %v818 = vunpack.c.l.b16 %v784
    %v819 = vunpack.c.l.b16 %v785
    %v820 = vunpack.c.l.b16 %v786
    %v821 = vunpack.c.l.b16 %v787
    %v822 = vunpack.c.l.b16 %v788
    %v823 = vunpack.c.l.b16 %v789
    %v824 = vunpack.c.l.b16 %v790
    %v825 = vunpack.c.l.b16 %v791
    %v826 = vpack.c.b16 %v811, %v810
    %v827 = vpack.c.b16 %v813, %v812
    %v828 = vpack.c.b16 %v815, %v814
    %v829 = vpack.c.b16 %v817, %v816
    %v830 = vpack.c.b16 %v819, %v818
    %v831 = vpack.c.b16 %v821, %v820
    %v832 = vpack.c.b16 %v823, %v822
    %v833 = vpack.c.b16 %v825, %v824
    %v835 = vsel %vm247, %v826, 0
    %v838 = vsel %vm247, %v827, 0
    %v841 = vsel %vm247, %v828, 0
    %v844 = vsel %vm247, %v829, 0
    %v847 = vsel %vm247, %v830, 0
    %v850 = vsel %vm247, %v831, 0
    %v853 = vsel %vm247, %v832, 0
    %v856 = vsel %vm247, %v833, 0
    %vm858 = vcmask 1043456
    %v860 = vsel %vm858, %v793, 0
    %862 = vmatpush.bf16.msra.mxu0 0
    %863 = vmatpush.bf16.msra.mxu0 0
    %864 = vmatpush.bf16.msra.mxu0 0
    %865 = vmatpush.bf16.msra.mxu0 0
    %866 = vmatpush.bf16.msra.mxu0 0
    %867 = vmatpush.bf16.msra.mxu0 0
    %868 = vmatpush.bf16.msra.mxu0 0
    %869 = vmatpush.bf16.msra.mxu0 %v860
    %870 = vmatmul.bf16.gmra.mxu0 %v835
    %v871 = vpop.f32.mrf.mxu0
    %v872 = vadd.f32 0.0, %v871
    %v873 = vpop.f32.mrf.mxu0
    %v874 = vadd.f32 0.0, %v873
    %875 = vmatmul.bf16.gmra.mxu0 %v838
    %v876 = vpop.f32.mrf.mxu0
    %v877 = vadd.f32 0.0, %v876
    %v878 = vpop.f32.mrf.mxu0
    %v879 = vadd.f32 0.0, %v878
    %880 = vmatmul.bf16.gmra.mxu0 %v841
    %v881 = vpop.f32.mrf.mxu0
    %v882 = vadd.f32 0.0, %v881
    %v883 = vpop.f32.mrf.mxu0
    %v884 = vadd.f32 0.0, %v883
    %885 = vmatmul.bf16.gmra.mxu0 %v844
    %v886 = vpop.f32.mrf.mxu0
    %v887 = vadd.f32 0.0, %v886
    %v888 = vpop.f32.mrf.mxu0
    %v889 = vadd.f32 0.0, %v888
    %890 = vmatmul.bf16.gmra.mxu0 %v847
    %v891 = vpop.f32.mrf.mxu0
    %v892 = vadd.f32 0.0, %v891
    %v893 = vpop.f32.mrf.mxu0
    %v894 = vadd.f32 0.0, %v893
    %895 = vmatmul.bf16.gmra.mxu0 %v850
    %v896 = vpop.f32.mrf.mxu0
    %v897 = vadd.f32 0.0, %v896
    %v898 = vpop.f32.mrf.mxu0
    %v899 = vadd.f32 0.0, %v898
    %900 = vmatmul.bf16.gmra.mxu0 %v853
    %v901 = vpop.f32.mrf.mxu0
    %v902 = vadd.f32 0.0, %v901
    %v903 = vpop.f32.mrf.mxu0
    %v904 = vadd.f32 0.0, %v903
    %905 = vmatmul.bf16.gmra.mxu0 %v856
    %v906 = vpop.f32.mrf.mxu0
    %v907 = vadd.f32 0.0, %v906
    %v908 = vpop.f32.mrf.mxu0
    %v909 = vadd.f32 0.0, %v908
    %910 = vdwg.mxu0
    %v927 = vunpack.c.l.b16 %v760
    %v928 = vunpack.c.l.b16 %v761
    %v929 = vunpack.c.l.b16 %v762
    %v930 = vunpack.c.l.b16 %v763
    %v931 = vunpack.c.l.b16 %v764
    %v932 = vunpack.c.l.b16 %v765
    %v933 = vunpack.c.l.b16 %v766
    %v934 = vunpack.c.l.b16 %v767
    %v935 = vunpack.c.l.b16 %v768
    %v936 = vunpack.c.l.b16 %v769
    %v937 = vunpack.c.l.b16 %v770
    %v938 = vunpack.c.l.b16 %v771
    %v939 = vunpack.c.l.b16 %v772
    %v940 = vunpack.c.l.b16 %v773
    %v941 = vunpack.c.l.b16 %v774
    %v942 = vunpack.c.l.b16 %v775
    %v943 = vpack.c.b16 %v928, %v927
    %v944 = vpack.c.b16 %v930, %v929
    %v945 = vpack.c.b16 %v932, %v931
    %v946 = vpack.c.b16 %v934, %v933
    %v947 = vpack.c.b16 %v936, %v935
    %v948 = vpack.c.b16 %v938, %v937
    %v949 = vpack.c.b16 %v940, %v939
    %v950 = vpack.c.b16 %v942, %v941
    %v952 = vsel %vm247, %v943, 0
    %v955 = vsel %vm247, %v944, 0
    %v958 = vsel %vm247, %v945, 0
    %v961 = vsel %vm247, %v946, 0
    %v964 = vsel %vm247, %v947, 0
    %v967 = vsel %vm247, %v948, 0
    %v970 = vsel %vm247, %v949, 0
    %v973 = vsel %vm247, %v950, 0
    %v976 = vsel %vm858, %v792, 0
    %978 = vmatpush.bf16.msra.mxu0 0
    %979 = vmatpush.bf16.msra.mxu0 0
    %980 = vmatpush.bf16.msra.mxu0 0
    %981 = vmatpush.bf16.msra.mxu0 0
    %982 = vmatpush.bf16.msra.mxu0 0
    %983 = vmatpush.bf16.msra.mxu0 0
    %984 = vmatpush.bf16.msra.mxu0 0
    %985 = vmatpush.bf16.msra.mxu0 %v976
    %986 = vmatmul.bf16.gmra.mxu0 %v952
    %v987 = vpop.f32.mrf.mxu0
    %v988 = vadd.f32 %v872, %v987
    %v989 = vpop.f32.mrf.mxu0
    %v990 = vadd.f32 %v874, %v989
    %991 = vmatmul.bf16.gmra.mxu0 %v955
    %v992 = vpop.f32.mrf.mxu0
    %v993 = vadd.f32 %v877, %v992
    %v994 = vpop.f32.mrf.mxu0
    %v995 = vadd.f32 %v879, %v994
    %996 = vmatmul.bf16.gmra.mxu0 %v958
    %v997 = vpop.f32.mrf.mxu0
    %v998 = vadd.f32 %v882, %v997
    %v999 = vpop.f32.mrf.mxu0
    %v1000 = vadd.f32 %v884, %v999
    %1001 = vmatmul.bf16.gmra.mxu0 %v961
    %v1002 = vpop.f32.mrf.mxu0
    %v1003 = vadd.f32 %v887, %v1002
    %v1004 = vpop.f32.mrf.mxu0
    %v1005 = vadd.f32 %v889, %v1004
    %1006 = vmatmul.bf16.gmra.mxu0 %v964
    %v1007 = vpop.f32.mrf.mxu0
    %v1008 = vadd.f32 %v892, %v1007
    %v1009 = vpop.f32.mrf.mxu0
    %v1010 = vadd.f32 %v894, %v1009
    %1011 = vmatmul.bf16.gmra.mxu0 %v967
    %v1012 = vpop.f32.mrf.mxu0
    %v1013 = vadd.f32 %v897, %v1012
    %v1014 = vpop.f32.mrf.mxu0
    %v1015 = vadd.f32 %v899, %v1014
    %1016 = vmatmul.bf16.gmra.mxu0 %v970
    %v1017 = vpop.f32.mrf.mxu0
    %v1018 = vadd.f32 %v902, %v1017
    %v1019 = vpop.f32.mrf.mxu0
    %v1020 = vadd.f32 %v904, %v1019
    %1021 = vmatmul.bf16.gmra.mxu0 %v973
    %v1022 = vpop.f32.mrf.mxu0
    %v1023 = vadd.f32 %v907, %v1022
    %v1024 = vpop.f32.mrf.mxu0
    %v1025 = vadd.f32 %v909, %v1024
    %1026 = vdwg.mxu0
    %v1027 = vld [vmem:[%s4] sm:$0x1]
    %v1029 = vperm.slane %v1027, 0
    %v1031 = vmul.f32 %v504, %v1029
    %v1032 = vmul.f32 %v505, %v1029
    %v1033 = vmul.f32 %v506, %v1029
    %v1034 = vmul.f32 %v507, %v1029
    %v1035 = vmul.f32 %v508, %v1029
    %v1036 = vmul.f32 %v509, %v1029
    %v1037 = vmul.f32 %v510, %v1029
    %v1038 = vmul.f32 %v511, %v1029
    %v1039 = vmul.f32 %v512, %v1029
    %v1040 = vmul.f32 %v513, %v1029
    %v1041 = vmul.f32 %v514, %v1029
    %v1042 = vmul.f32 %v515, %v1029
    %v1043 = vmul.f32 %v516, %v1029
    %v1044 = vmul.f32 %v517, %v1029
    %v1045 = vmul.f32 %v518, %v1029
    %v1046 = vmul.f32 %v519, %v1029
    %v1047 = vsub.f32 %v988, %v1031
    %v1048 = vsub.f32 %v990, %v1032
    %v1049 = vsub.f32 %v993, %v1033
    %v1050 = vsub.f32 %v995, %v1034
    %v1051 = vsub.f32 %v998, %v1035
    %v1052 = vsub.f32 %v1000, %v1036
    %v1053 = vsub.f32 %v1003, %v1037
    %v1054 = vsub.f32 %v1005, %v1038
    %v1055 = vsub.f32 %v1008, %v1039
    %v1056 = vsub.f32 %v1010, %v1040
    %v1057 = vsub.f32 %v1013, %v1041
    %v1058 = vsub.f32 %v1015, %v1042
    %v1059 = vsub.f32 %v1018, %v1043
    %v1060 = vsub.f32 %v1020, %v1044
    %v1061 = vsub.f32 %v1023, %v1045
    %v1062 = vsub.f32 %v1025, %v1046
    %v1063 = vmul.f32 %v609, %v1047
    %v1064 = vmul.f32 %v619, %v1048
    %v1065 = vmul.f32 %v629, %v1049
    %v1066 = vmul.f32 %v639, %v1050
    %v1067 = vmul.f32 %v649, %v1051
    %v1068 = vmul.f32 %v659, %v1052
    %v1069 = vmul.f32 %v669, %v1053
    %v1070 = vmul.f32 %v679, %v1054
    %v1071 = vmul.f32 %v689, %v1055
    %v1072 = vmul.f32 %v699, %v1056
    %v1073 = vmul.f32 %v709, %v1057
    %v1074 = vmul.f32 %v719, %v1058
    %v1075 = vmul.f32 %v729, %v1059
    %v1076 = vmul.f32 %v739, %v1060
    %v1077 = vmul.f32 %v749, %v1061
    %v1078 = vmul.f32 %v759, %v1062
    %v1079 = vld [vmem:[%s5] sm:$0x1]
    %v1081 = vperm.slane %v1079, 0
    %v1083 = vadd.f32 %v1063, %v1081
    %v1084 = vadd.f32 %v1064, %v1081
    %v1085 = vadd.f32 %v1065, %v1081
    %v1086 = vadd.f32 %v1066, %v1081
    %v1087 = vadd.f32 %v1067, %v1081
    %v1088 = vadd.f32 %v1068, %v1081
    %v1089 = vadd.f32 %v1069, %v1081
    %v1090 = vadd.f32 %v1070, %v1081
    %v1091 = vadd.f32 %v1071, %v1081
    %v1092 = vadd.f32 %v1072, %v1081
    %v1093 = vadd.f32 %v1073, %v1081
    %v1094 = vadd.f32 %v1074, %v1081
    %v1095 = vadd.f32 %v1075, %v1081
    %v1096 = vadd.f32 %v1076, %v1081
    %v1097 = vadd.f32 %v1077, %v1081
    %v1098 = vadd.f32 %v1078, %v1081
    %1099 = vst.msk [vmem:[%s6] sm:$0xff] %vm247, %v1083
    %1100 = vst.msk [vmem:[%s6 + $0x8] sm:$0xff] %vm247, %v1084
    %1101 = vst.msk [vmem:[%s6 + $0x10] sm:$0xff] %vm247, %v1085
    %1102 = vst.msk [vmem:[%s6 + $0x18] sm:$0xff] %vm247, %v1086
    %1103 = vst.msk [vmem:[%s6 + $0x20] sm:$0xff] %vm247, %v1087
    %1104 = vst.msk [vmem:[%s6 + $0x28] sm:$0xff] %vm247, %v1088
    %1105 = vst.msk [vmem:[%s6 + $0x30] sm:$0xff] %vm247, %v1089
    %1106 = vst.msk [vmem:[%s6 + $0x38] sm:$0xff] %vm247, %v1090
    %1107 = vst.msk [vmem:[%s6 + $0x40] sm:$0xff] %vm247, %v1091
    %1108 = vst.msk [vmem:[%s6 + $0x48] sm:$0xff] %vm247, %v1092
    %1109 = vst.msk [vmem:[%s6 + $0x50] sm:$0xff] %vm247, %v1093
    %1110 = vst.msk [vmem:[%s6 + $0x58] sm:$0xff] %vm247, %v1094
    %1111 = vst.msk [vmem:[%s6 + $0x60] sm:$0xff] %vm247, %v1095
    %1112 = vst.msk [vmem:[%s6 + $0x68] sm:$0xff] %vm247, %v1096
    %1113 = vst.msk [vmem:[%s6 + $0x70] sm:$0xff] %vm247, %v1097
    %1114 = vst.msk [vmem:[%s6 + $0x78] sm:$0xff] %vm247, %v1098
    // Predicated region
    $region102: #{tpu_custom_call.1} parent=1 // pred_check
      _
    $region103: #{tpu_custom_call.1} parent=1 // pred_check_branch
      %1116 = sbr.rel (0) target = $region105
    $region104: #{tpu_custom_call.1} parent=1 // pred_region
      _
    $region105: #{tpu_custom_call.1} parent=1 // pred_fallthru
      _
    // Predicated region
    $region106: #{tpu_custom_call.1} parent=1 // pred_check
      _
    $region107: #{tpu_custom_call.1} parent=1 // pred_check_branch
      %1118 = sbr.rel (0) target = $region109
    $region108: #{tpu_custom_call.1} parent=1 // pred_region
      _
    $region109: #{tpu_custom_call.1} parent=1 // pred_fallthru
      _

// kernel: tpu_custom_call.1
$region0: #{tpu_custom_call.1}
  #allocation0 [shape = 'u32[]', space=smem, size = 0x4, offset = 0x4, fixed_abs, tag = 'smem constant byte address 0x4 - core index']
  #allocation1 [shape = 'u32[72,128]{1,0:T(1,128)}', space=vmem, size = 0x9000, scoped, tag = 'internal scratch']
  %s0 = inlined_call_operand.vmem [shape: f32[16,2,8,8], index: 0, kind: input, shape index: {}]
  %s1 = inlined_call_operand.vmem [shape: f32[16,2,8,8], index: 1, kind: input, shape index: {}]
  %s2 = inlined_call_operand.vmem [shape: bf16[8,8], index: 2, kind: input, shape index: {}]
  %s3 = inlined_call_operand.vmem [shape: bf16[8,8], index: 3, kind: input, shape index: {}]
  %s4 = inlined_call_operand.vmem [shape: f32[1,8], index: 4, kind: input, shape index: {}]
  %s5 = inlined_call_operand.vmem [shape: f32[1,8], index: 5, kind: input, shape index: {}]
  %s6 = inlined_call_operand.vmem [shape: f32[128,8], index: 6, kind: output, shape index: {}]
  %s7 = sld [smem:[#allocation0]]
  $region110: #{tpu_custom_call.1} parent=0
    _
  %s9 = ssub.s32 1, %s7
  %s10 = scalar_select 0, %s9, %s7
  $region1: #{tpu_custom_call.1} parent=0
    #allocation2 [shape = 'u8[65536]{0}', space=vmem, size = 0x10000, scoped, tag = 'input window, operand 0, single buffered']
    #allocation3 [shape = 'u8[65536]{0}', space=vmem, size = 0x10000, scoped, tag = 'input window, operand 1, single buffered']
    // Predicated region
    $region2: #{tpu_custom_call.1} parent=1 // pred_check
      _
    $region3: #{tpu_custom_call.1} parent=1 // pred_check_branch
      %12 = sbr.rel (0) target = $region5
    $region4: #{tpu_custom_call.1} parent=1 // pred_region
      // Predicated region
      $region6: #{tpu_custom_call.1} parent=4 // pred_check
        _
      $region7: #{tpu_custom_call.1} parent=4 // pred_check_branch
        %14 = sbr.rel (0) target = $region9
      $region8: #{tpu_custom_call.1} parent=4 // pred_region
        // Predicated region
        $region10: #{tpu_custom_call.1} parent=8 // pred_check
          _
        $region11: #{tpu_custom_call.1} parent=8 // pred_check_branch
          %16 = sbr.rel (0) target = $region13
        $region12: #{tpu_custom_call.1} parent=8 // pred_region
          // Predicated region
          $region25: #{tpu_custom_call.1} parent=12 // pred_check
            _
          $region26: #{tpu_custom_call.1} parent=12 // pred_check_branch
            %62 = sbr.rel (0) target = $region28
          $region27: #{tpu_custom_call.1} parent=12 // pred_region
            loop: start=0, step=1, limit=1
            $region29: #{tpu_custom_call.1} parent=27 // loop_pre_header
              _
            $region30: #{tpu_custom_call.1} parent=27 // loop_header
              %s64 = sphi 0, %s68
              %p65 = scmp.ge.s32.totalorder %s64, 1
              %s69 = sphi %s0, %s0
              %s70 = sphi [#allocation2], [#allocation2]
            $region31: #{tpu_custom_call.1} parent=27 // loop_header_branch
              %67 = sbr.rel (%p65) target = $region35
            $region32: #{tpu_custom_call.1} parent=27 // loop_body
              %v71 = vld [vmem:[%s69] sm:$0xff]
              %72 = vst [vmem:[%s70] sm:$0xff] %v71
              %v73 = vld [vmem:[%s69 + $0x10] sm:$0xff]
              %74 = vst [vmem:[%s70 + $0x8] sm:$0xff] %v73
              %v75 = vld [vmem:[%s69 + $0x20] sm:$0xff]
              %76 = vst [vmem:[%s70 + $0x10] sm:$0xff] %v75
              %v77 = vld [vmem:[%s69 + $0x30] sm:$0xff]
              %78 = vst [vmem:[%s70 + $0x18] sm:$0xff] %v77
              %v79 = vld [vmem:[%s69 + $0x40] sm:$0xff]
              %80 = vst [vmem:[%s70 + $0x20] sm:$0xff] %v79
              %v81 = vld [vmem:[%s69 + $0x50] sm:$0xff]
              %82 = vst [vmem:[%s70 + $0x28] sm:$0xff] %v81
              %v83 = vld [vmem:[%s69 + $0x60] sm:$0xff]
              %84 = vst [vmem:[%s70 + $0x30] sm:$0xff] %v83
              %v85 = vld [vmem:[%s69 + $0x70] sm:$0xff]
              %86 = vst [vmem:[%s70 + $0x38] sm:$0xff] %v85
              %v87 = vld [vmem:[%s69 + $0x80] sm:$0xff]
              %88 = vst [vmem:[%s70 + $0x40] sm:$0xff] %v87
              %v89 = vld [vmem:[%s69 + $0x90] sm:$0xff]
              %90 = vst [vmem:[%s70 + $0x48] sm:$0xff] %v89
              %v91 = vld [vmem:[%s69 + $0xa0] sm:$0xff]
              %92 = vst [vmem:[%s70 + $0x50] sm:$0xff] %v91
              %v93 = vld [vmem:[%s69 + $0xb0] sm:$0xff]
              %94 = vst [vmem:[%s70 + $0x58] sm:$0xff] %v93
              %v95 = vld [vmem:[%s69 + $0xc0] sm:$0xff]
              %96 = vst [vmem:[%s70 + $0x60] sm:$0xff] %v95
              %v97 = vld [vmem:[%s69 + $0xd0] sm:$0xff]
              %98 = vst [vmem:[%s70 + $0x68] sm:$0xff] %v97
              %v99 = vld [vmem:[%s69 + $0xe0] sm:$0xff]
              %100 = vst [vmem:[%s70 + $0x70] sm:$0xff] %v99
              %v101 = vld [vmem:[%s69 + $0xf0] sm:$0xff]
              %102 = vst [vmem:[%s70 + $0x78] sm:$0xff] %v101
            $region33: #{tpu_custom_call.1} parent=27 // loop_footer
              %s68 = sadd.s32 1, %s64
            $region34: #{tpu_custom_call.1} parent=27 // loop_footer_branch
              %63 = sbr.rel target = $region30
            $region35: #{tpu_custom_call.1} parent=27 // loop_exit
              _
          $region28: #{tpu_custom_call.1} parent=12 // pred_fallthru
            _
          // Predicated region
          $region36: #{tpu_custom_call.1} parent=12 // pred_check
            _
          $region37: #{tpu_custom_call.1} parent=12 // pred_check_branch
            %104 = sbr.rel target = $region39
          $region38: #{tpu_custom_call.1} parent=12 // pred_region
            _
          $region39: #{tpu_custom_call.1} parent=12 // pred_fallthru
            _
        $region13: #{tpu_custom_call.1} parent=8 // pred_fallthru
          _
        // Predicated region
        $region14: #{tpu_custom_call.1} parent=8 // pred_check
          _
        $region15: #{tpu_custom_call.1} parent=8 // pred_check_branch
          %18 = sbr.rel target = $region17
        $region16: #{tpu_custom_call.1} parent=8 // pred_region
          %s20 = ssub.s32 256, 1
          loop: start=0, step=1, limit=1
          $region18: #{tpu_custom_call.1} parent=16 // loop_pre_header
            _
          $region19: #{tpu_custom_call.1} parent=16 // loop_header
            %s22 = sphi 0, %s26
            %p23 = scmp.ge.s32.totalorder %s22, 1
            %s27 = sphi %s0, %s0
            %s28 = sphi [#allocation2], [#allocation2]
          $region20: #{tpu_custom_call.1} parent=16 // loop_header_branch
            %25 = sbr.rel (%p23) target = $region24
          $region21: #{tpu_custom_call.1} parent=16 // loop_body
            %v29 = vld [vmem:[%s27] sm:%s20]
            %30 = vst [vmem:[%s28] sm:%s20] %v29
            %v31 = vld [vmem:[%s27 + $0x10] sm:%s20]
            %32 = vst [vmem:[%s28 + $0x8] sm:%s20] %v31
            %v33 = vld [vmem:[%s27 + $0x20] sm:%s20]
            %34 = vst [vmem:[%s28 + $0x10] sm:%s20] %v33
            %v35 = vld [vmem:[%s27 + $0x30] sm:%s20]
            %36 = vst [vmem:[%s28 + $0x18] sm:%s20] %v35
            %v37 = vld [vmem:[%s27 + $0x40] sm:%s20]
            %38 = vst [vmem:[%s28 + $0x20] sm:%s20] %v37
            %v39 = vld [vmem:[%s27 + $0x50] sm:%s20]
            %40 = vst [vmem:[%s28 + $0x28] sm:%s20] %v39
            %v41 = vld [vmem:[%s27 + $0x60] sm:%s20]
            %42 = vst [vmem:[%s28 + $0x30] sm:%s20] %v41
            %v43 = vld [vmem:[%s27 + $0x70] sm:%s20]
            %44 = vst [vmem:[%s28 + $0x38] sm:%s20] %v43
            %v45 = vld [vmem:[%s27 + $0x80] sm:%s20]
            %46 = vst [vmem:[%s28 + $0x40] sm:%s20] %v45
            %v47 = vld [vmem:[%s27 + $0x90] sm:%s20]
            %48 = vst [vmem:[%s28 + $0x48] sm:%s20] %v47
            %v49 = vld [vmem:[%s27 + $0xa0] sm:%s20]
            %50 = vst [vmem:[%s28 + $0x50] sm:%s20] %v49
            %v51 = vld [vmem:[%s27 + $0xb0] sm:%s20]
            %52 = vst [vmem:[%s28 + $0x58] sm:%s20] %v51
            %v53 = vld [vmem:[%s27 + $0xc0] sm:%s20]
            %54 = vst [vmem:[%s28 + $0x60] sm:%s20] %v53
            %v55 = vld [vmem:[%s27 + $0xd0] sm:%s20]
            %56 = vst [vmem:[%s28 + $0x68] sm:%s20] %v55
            %v57 = vld [vmem:[%s27 + $0xe0] sm:%s20]
            %58 = vst [vmem:[%s28 + $0x70] sm:%s20] %v57
            %v59 = vld [vmem:[%s27 + $0xf0] sm:%s20]
            %60 = vst [vmem:[%s28 + $0x78] sm:%s20] %v59
          $region22: #{tpu_custom_call.1} parent=16 // loop_footer
            %s26 = sadd.s32 1, %s22
          $region23: #{tpu_custom_call.1} parent=16 // loop_footer_branch
            %21 = sbr.rel target = $region19
          $region24: #{tpu_custom_call.1} parent=16 // loop_exit
            _
        $region17: #{tpu_custom_call.1} parent=8 // pred_fallthru
          _
      $region9: #{tpu_custom_call.1} parent=4 // pred_fallthru
        _
      %105 = vnop
    $region5: #{tpu_custom_call.1} parent=1 // pred_fallthru
      _
    // Predicated region
    $region40: #{tpu_custom_call.1} parent=1 // pred_check
      _
    $region41: #{tpu_custom_call.1} parent=1 // pred_check_branch
      %107 = sbr.rel (0) target = $region43
    $region42: #{tpu_custom_call.1} parent=1 // pred_region
      %s108 = scalar_lea.vmem %s1, 8
      // Predicated region
      $region44: #{tpu_custom_call.1} parent=42 // pred_check
        _
      $region45: #{tpu_custom_call.1} parent=42 // pred_check_branch
        %110 = sbr.rel (0) target = $region47
      $region46: #{tpu_custom_call.1} parent=42 // pred_region
        // Predicated region
        $region48: #{tpu_custom_call.1} parent=46 // pred_check
          _
        $region49: #{tpu_custom_call.1} parent=46 // pred_check_branch
          %112 = sbr.rel (0) target = $region51
        $region50: #{tpu_custom_call.1} parent=46 // pred_region
          // Predicated region
          $region63: #{tpu_custom_call.1} parent=50 // pred_check
            _
          $region64: #{tpu_custom_call.1} parent=50 // pred_check_branch
            %158 = sbr.rel (0) target = $region66
          $region65: #{tpu_custom_call.1} parent=50 // pred_region
            loop: start=0, step=1, limit=1
            $region67: #{tpu_custom_call.1} parent=65 // loop_pre_header
              _
            $region68: #{tpu_custom_call.1} parent=65 // loop_header
              %s160 = sphi 0, %s164
              %p161 = scmp.ge.s32.totalorder %s160, 1
              %s165 = sphi %s108, %s108
              %s166 = sphi [#allocation3], [#allocation3]
            $region69: #{tpu_custom_call.1} parent=65 // loop_header_branch
              %163 = sbr.rel (%p161) target = $region73
            $region70: #{tpu_custom_call.1} parent=65 // loop_body
              %v167 = vld [vmem:[%s165] sm:$0xff]
              %168 = vst [vmem:[%s166] sm:$0xff] %v167
              %v169 = vld [vmem:[%s165 + $0x10] sm:$0xff]
              %170 = vst [vmem:[%s166 + $0x8] sm:$0xff] %v169
              %v171 = vld [vmem:[%s165 + $0x20] sm:$0xff]
              %172 = vst [vmem:[%s166 + $0x10] sm:$0xff] %v171
              %v173 = vld [vmem:[%s165 + $0x30] sm:$0xff]
              %174 = vst [vmem:[%s166 + $0x18] sm:$0xff] %v173
              %v175 = vld [vmem:[%s165 + $0x40] sm:$0xff]
              %176 = vst [vmem:[%s166 + $0x20] sm:$0xff] %v175
              %v177 = vld [vmem:[%s165 + $0x50] sm:$0xff]
              %178 = vst [vmem:[%s166 + $0x28] sm:$0xff] %v177
              %v179 = vld [vmem:[%s165 + $0x60] sm:$0xff]
              %180 = vst [vmem:[%s166 + $0x30] sm:$0xff] %v179
              %v181 = vld [vmem:[%s165 + $0x70] sm:$0xff]
              %182 = vst [vmem:[%s166 + $0x38] sm:$0xff] %v181
              %v183 = vld [vmem:[%s165 + $0x80] sm:$0xff]
              %184 = vst [vmem:[%s166 + $0x40] sm:$0xff] %v183
              %v185 = vld [vmem:[%s165 + $0x90] sm:$0xff]
              %186 = vst [vmem:[%s166 + $0x48] sm:$0xff] %v185
              %v187 = vld [vmem:[%s165 + $0xa0] sm:$0xff]
              %188 = vst [vmem:[%s166 + $0x50] sm:$0xff] %v187
              %v189 = vld [vmem:[%s165 + $0xb0] sm:$0xff]
              %190 = vst [vmem:[%s166 + $0x58] sm:$0xff] %v189
              %v191 = vld [vmem:[%s165 + $0xc0] sm:$0xff]
              %192 = vst [vmem:[%s166 + $0x60] sm:$0xff] %v191
              %v193 = vld [vmem:[%s165 + $0xd0] sm:$0xff]
              %194 = vst [vmem:[%s166 + $0x68] sm:$0xff] %v193
              %v195 = vld [vmem:[%s165 + $0xe0] sm:$0xff]
              %196 = vst [vmem:[%s166 + $0x70] sm:$0xff] %v195
              %v197 = vld [vmem:[%s165 + $0xf0] sm:$0xff]
              %198 = vst [vmem:[%s166 + $0x78] sm:$0xff] %v197
            $region71: #{tpu_custom_call.1} parent=65 // loop_footer
              %s164 = sadd.s32 1, %s160
            $region72: #{tpu_custom_call.1} parent=65 // loop_footer_branch
              %159 = sbr.rel target = $region68
            $region73: #{tpu_custom_call.1} parent=65 // loop_exit
              _
          $region66: #{tpu_custom_call.1} parent=50 // pred_fallthru
            _
          // Predicated region
          $region74: #{tpu_custom_call.1} parent=50 // pred_check
            _
          $region75: #{tpu_custom_call.1} parent=50 // pred_check_branch
            %200 = sbr.rel target = $region77
          $region76: #{tpu_custom_call.1} parent=50 // pred_region
            _
          $region77: #{tpu_custom_call.1} parent=50 // pred_fallthru
            _
        $region51: #{tpu_custom_call.1} parent=46 // pred_fallthru
          _
        // Predicated region
        $region52: #{tpu_custom_call.1} parent=46 // pred_check
          _
        $region53: #{tpu_custom_call.1} parent=46 // pred_check_branch
          %114 = sbr.rel target = $region55
        $region54: #{tpu_custom_call.1} parent=46 // pred_region
          %s116 = ssub.s32 256, 1
          loop: start=0, step=1, limit=1
          $region56: #{tpu_custom_call.1} parent=54 // loop_pre_header
            _
          $region57: #{tpu_custom_call.1} parent=54 // loop_header
            %s118 = sphi 0, %s122
            %p119 = scmp.ge.s32.totalorder %s118, 1
            %s123 = sphi %s108, %s108
            %s124 = sphi [#allocation3], [#allocation3]
          $region58: #{tpu_custom_call.1} parent=54 // loop_header_branch
            %121 = sbr.rel (%p119) target = $region62
          $region59: #{tpu_custom_call.1} parent=54 // loop_body
            %v125 = vld [vmem:[%s123] sm:%s116]
            %126 = vst [vmem:[%s124] sm:%s116] %v125
            %v127 = vld [vmem:[%s123 + $0x10] sm:%s116]
            %128 = vst [vmem:[%s124 + $0x8] sm:%s116] %v127
            %v129 = vld [vmem:[%s123 + $0x20] sm:%s116]
            %130 = vst [vmem:[%s124 + $0x10] sm:%s116] %v129
            %v131 = vld [vmem:[%s123 + $0x30] sm:%s116]
            %132 = vst [vmem:[%s124 + $0x18] sm:%s116] %v131
            %v133 = vld [vmem:[%s123 + $0x40] sm:%s116]
            %134 = vst [vmem:[%s124 + $0x20] sm:%s116] %v133
            %v135 = vld [vmem:[%s123 + $0x50] sm:%s116]
            %136 = vst [vmem:[%s124 + $0x28] sm:%s116] %v135
            %v137 = vld [vmem:[%s123 + $0x60] sm:%s116]
            %138 = vst [vmem:[%s124 + $0x30] sm:%s116] %v137
            %v139 = vld [vmem:[%s123 + $0x70] sm:%s116]
            %140 = vst [vmem:[%s124 + $0x38] sm:%s116] %v139
            %v141 = vld [vmem:[%s123 + $0x80] sm:%s116]
            %142 = vst [vmem:[%s124 + $0x40] sm:%s116] %v141
            %v143 = vld [vmem:[%s123 + $0x90] sm:%s116]
            %144 = vst [vmem:[%s124 + $0x48] sm:%s116] %v143
            %v145 = vld [vmem:[%s123 + $0xa0] sm:%s116]
            %146 = vst [vmem:[%s124 + $0x50] sm:%s116] %v145
            %v147 = vld [vmem:[%s123 + $0xb0] sm:%s116]
            %148 = vst [vmem:[%s124 + $0x58] sm:%s116] %v147
            %v149 = vld [vmem:[%s123 + $0xc0] sm:%s116]
            %150 = vst [vmem:[%s124 + $0x60] sm:%s116] %v149
            %v151 = vld [vmem:[%s123 + $0xd0] sm:%s116]
            %152 = vst [vmem:[%s124 + $0x68] sm:%s116] %v151
            %v153 = vld [vmem:[%s123 + $0xe0] sm:%s116]
            %154 = vst [vmem:[%s124 + $0x70] sm:%s116] %v153
            %v155 = vld [vmem:[%s123 + $0xf0] sm:%s116]
            %156 = vst [vmem:[%s124 + $0x78] sm:%s116] %v155
          $region60: #{tpu_custom_call.1} parent=54 // loop_footer
            %s122 = sadd.s32 1, %s118
          $region61: #{tpu_custom_call.1} parent=54 // loop_footer_branch
            %117 = sbr.rel target = $region57
          $region62: #{tpu_custom_call.1} parent=54 // loop_exit
            _
        $region55: #{tpu_custom_call.1} parent=46 // pred_fallthru
          _
      $region47: #{tpu_custom_call.1} parent=42 // pred_fallthru
        _
      %201 = vnop
    $region43: #{tpu_custom_call.1} parent=1 // pred_fallthru
      _
    // Predicated region
    $region78: #{tpu_custom_call.1} parent=1 // pred_check
      _
    $region79: #{tpu_custom_call.1} parent=1 // pred_check_branch
      %203 = sbr.rel (0) target = $region81
    $region80: #{tpu_custom_call.1} parent=1 // pred_region
      _
    $region81: #{tpu_custom_call.1} parent=1 // pred_fallthru
      _
    // Predicated region
    $region82: #{tpu_custom_call.1} parent=1 // pred_check
      _
    $region83: #{tpu_custom_call.1} parent=1 // pred_check_branch
      %205 = sbr.rel (0) target = $region85
    $region84: #{tpu_custom_call.1} parent=1 // pred_region
      _
    $region85: #{tpu_custom_call.1} parent=1 // pred_fallthru
      _
    // Predicated region
    $region86: #{tpu_custom_call.1} parent=1 // pred_check
      _
    $region87: #{tpu_custom_call.1} parent=1 // pred_check_branch
      %207 = sbr.rel (0) target = $region89
    $region88: #{tpu_custom_call.1} parent=1 // pred_region
      _
    $region89: #{tpu_custom_call.1} parent=1 // pred_fallthru
      _
    // Predicated region
    $region90: #{tpu_custom_call.1} parent=1 // pred_check
      _
    $region91: #{tpu_custom_call.1} parent=1 // pred_check_branch
      %209 = sbr.rel (0) target = $region93
    $region92: #{tpu_custom_call.1} parent=1 // pred_region
      _
    $region93: #{tpu_custom_call.1} parent=1 // pred_fallthru
      _
    // Predicated region
    $region94: #{tpu_custom_call.1} parent=1 // pred_check
      _
    $region95: #{tpu_custom_call.1} parent=1 // pred_check_branch
      %211 = sbr.rel (0) target = $region97
    $region96: #{tpu_custom_call.1} parent=1 // pred_region
      _
    $region97: #{tpu_custom_call.1} parent=1 // pred_fallthru
      _
    // Predicated region
    $region98: #{tpu_custom_call.1} parent=1 // pred_check
      _
    $region99: #{tpu_custom_call.1} parent=1 // pred_check_branch
      %213 = sbr.rel (0) target = $region101
    $region100: #{tpu_custom_call.1} parent=1 // pred_region
      _
    $region101: #{tpu_custom_call.1} parent=1 // pred_fallthru
      _
    %v215 = vld [vmem:[#allocation2] sm:$0xff]
    %v216 = vld [vmem:[#allocation2 + $0x8] sm:$0xff]
    %v217 = vld [vmem:[#allocation2 + $0x10] sm:$0xff]
    %v218 = vld [vmem:[#allocation2 + $0x18] sm:$0xff]
    %v219 = vld [vmem:[#allocation2 + $0x20] sm:$0xff]
    %v220 = vld [vmem:[#allocation2 + $0x28] sm:$0xff]
    %v221 = vld [vmem:[#allocation2 + $0x30] sm:$0xff]
    %v222 = vld [vmem:[#allocation2 + $0x38] sm:$0xff]
    %v223 = vld [vmem:[#allocation2 + $0x40] sm:$0xff]
    %v224 = vld [vmem:[#allocation2 + $0x48] sm:$0xff]
    %v225 = vld [vmem:[#allocation2 + $0x50] sm:$0xff]
    %v226 = vld [vmem:[#allocation2 + $0x58] sm:$0xff]
    %v227 = vld [vmem:[#allocation2 + $0x60] sm:$0xff]
    %v228 = vld [vmem:[#allocation2 + $0x68] sm:$0xff]
    %v229 = vld [vmem:[#allocation2 + $0x70] sm:$0xff]
    %v230 = vld [vmem:[#allocation2 + $0x78] sm:$0xff]
    %v231 = vld [vmem:[#allocation3] sm:$0xff]
    %v232 = vld [vmem:[#allocation3 + $0x8] sm:$0xff]
    %v233 = vld [vmem:[#allocation3 + $0x10] sm:$0xff]
    %v234 = vld [vmem:[#allocation3 + $0x18] sm:$0xff]
    %v235 = vld [vmem:[#allocation3 + $0x20] sm:$0xff]
    %v236 = vld [vmem:[#allocation3 + $0x28] sm:$0xff]
    %v237 = vld [vmem:[#allocation3 + $0x30] sm:$0xff]
    %v238 = vld [vmem:[#allocation3 + $0x38] sm:$0xff]
    %v239 = vld [vmem:[#allocation3 + $0x40] sm:$0xff]
    %v240 = vld [vmem:[#allocation3 + $0x48] sm:$0xff]
    %v241 = vld [vmem:[#allocation3 + $0x50] sm:$0xff]
    %v242 = vld [vmem:[#allocation3 + $0x58] sm:$0xff]
    %v243 = vld [vmem:[#allocation3 + $0x60] sm:$0xff]
    %v244 = vld [vmem:[#allocation3 + $0x68] sm:$0xff]
    %v245 = vld [vmem:[#allocation3 + $0x70] sm:$0xff]
    %v246 = vld [vmem:[#allocation3 + $0x78] sm:$0xff]
    %vm247 = vcmask 64512
    %v248 = vsel %vm247, %v215, 0.0
    %249 = vadd.xlane.f32.xlu0 %v248
    %v250 = vpop.xlane.xlu0 %249
    %v251 = vsel %vm247, %v216, 0.0
    %252 = vadd.xlane.f32.xlu0 %v251
    %v253 = vpop.xlane.xlu0 %252
    %v254 = vsel %vm247, %v217, 0.0
    %255 = vadd.xlane.f32.xlu0 %v254
    %v256 = vpop.xlane.xlu0 %255
    %v257 = vsel %vm247, %v218, 0.0
    %258 = vadd.xlane.f32.xlu0 %v257
    %v259 = vpop.xlane.xlu0 %258
    %v260 = vsel %vm247, %v219, 0.0
    %261 = vadd.xlane.f32.xlu0 %v260
    %v262 = vpop.xlane.xlu0 %261
    %v263 = vsel %vm247, %v220, 0.0
    %264 = vadd.xlane.f32.xlu0 %v263
    %v265 = vpop.xlane.xlu0 %264
    %v266 = vsel %vm247, %v221, 0.0
    %267 = vadd.xlane.f32.xlu0 %v266
    %v268 = vpop.xlane.xlu0 %267
    %v269 = vsel %vm247, %v222, 0.0
    %270 = vadd.xlane.f32.xlu0 %v269
    %v271 = vpop.xlane.xlu0 %270
    %v272 = vsel %vm247, %v223, 0.0
    %273 = vadd.xlane.f32.xlu0 %v272
    %v274 = vpop.xlane.xlu0 %273
    %v275 = vsel %vm247, %v224, 0.0
    %276 = vadd.xlane.f32.xlu0 %v275
    %v277 = vpop.xlane.xlu0 %276
    %v278 = vsel %vm247, %v225, 0.0
    %279 = vadd.xlane.f32.xlu0 %v278
    %v280 = vpop.xlane.xlu0 %279
    %v281 = vsel %vm247, %v226, 0.0
    %282 = vadd.xlane.f32.xlu0 %v281
    %v283 = vpop.xlane.xlu0 %282
    %v284 = vsel %vm247, %v227, 0.0
    %285 = vadd.xlane.f32.xlu0 %v284
    %v286 = vpop.xlane.xlu0 %285
    %v287 = vsel %vm247, %v228, 0.0
    %288 = vadd.xlane.f32.xlu0 %v287
    %v289 = vpop.xlane.xlu0 %288
    %v290 = vsel %vm247, %v229, 0.0
    %291 = vadd.xlane.f32.xlu0 %v290
    %v292 = vpop.xlane.xlu0 %291
    %v293 = vsel %vm247, %v230, 0.0
    %294 = vadd.xlane.f32.xlu0 %v293
    %v295 = vpop.xlane.xlu0 %294
    %v296 = vsel %vm247, %v231, 0.0
    %297 = vadd.xlane.f32.xlu0 %v296
    %v298 = vpop.xlane.xlu0 %297
    %v299 = vsel %vm247, %v232, 0.0
    %300 = vadd.xlane.f32.xlu0 %v299
    %v301 = vpop.xlane.xlu0 %300
    %v302 = vsel %vm247, %v233, 0.0
    %303 = vadd.xlane.f32.xlu0 %v302
    %v304 = vpop.xlane.xlu0 %303
    %v305 = vsel %vm247, %v234, 0.0
    %306 = vadd.xlane.f32.xlu0 %v305
    %v307 = vpop.xlane.xlu0 %306
    %v308 = vsel %vm247, %v235, 0.0
    %309 = vadd.xlane.f32.xlu0 %v308
    %v310 = vpop.xlane.xlu0 %309
    %v311 = vsel %vm247, %v236, 0.0
    %312 = vadd.xlane.f32.xlu0 %v311
    %v313 = vpop.xlane.xlu0 %312
    %v314 = vsel %vm247, %v237, 0.0
    %315 = vadd.xlane.f32.xlu0 %v314
    %v316 = vpop.xlane.xlu0 %315
    %v317 = vsel %vm247, %v238, 0.0
    %318 = vadd.xlane.f32.xlu0 %v317
    %v319 = vpop.xlane.xlu0 %318
    %v320 = vsel %vm247, %v239, 0.0
    %321 = vadd.xlane.f32.xlu0 %v320
    %v322 = vpop.xlane.xlu0 %321
    %v323 = vsel %vm247, %v240, 0.0
    %324 = vadd.xlane.f32.xlu0 %v323
    %v325 = vpop.xlane.xlu0 %324
    %v326 = vsel %vm247, %v241, 0.0
    %327 = vadd.xlane.f32.xlu0 %v326
    %v328 = vpop.xlane.xlu0 %327
    %v329 = vsel %vm247, %v242, 0.0
    %330 = vadd.xlane.f32.xlu0 %v329
    %v331 = vpop.xlane.xlu0 %330
    %v332 = vsel %vm247, %v243, 0.0
    %333 = vadd.xlane.f32.xlu0 %v332
    %v334 = vpop.xlane.xlu0 %333
    %v335 = vsel %vm247, %v244, 0.0
    %336 = vadd.xlane.f32.xlu0 %v335
    %v337 = vpop.xlane.xlu0 %336
    %v338 = vsel %vm247, %v245, 0.0
    %339 = vadd.xlane.f32.xlu0 %v338
    %v340 = vpop.xlane.xlu0 %339
    %v341 = vsel %vm247, %v246, 0.0
    %342 = vadd.xlane.f32.xlu0 %v341
    %v343 = vpop.xlane.xlu0 %342
    %v344 = vadd.f32 %v250, %v298
    %v345 = vadd.f32 %v253, %v301
    %v346 = vadd.f32 %v256, %v304
    %v347 = vadd.f32 %v259, %v307
    %v348 = vadd.f32 %v262, %v310
    %v349 = vadd.f32 %v265, %v313
    %v350 = vadd.f32 %v268, %v316
    %v351 = vadd.f32 %v271, %v319
    %v352 = vadd.f32 %v274, %v322
    %v353 = vadd.f32 %v277, %v325
    %v354 = vadd.f32 %v280, %v328
    %v355 = vadd.f32 %v283, %v331
    %v356 = vadd.f32 %v286, %v334
    %v357 = vadd.f32 %v289, %v337
    %v358 = vadd.f32 %v292, %v340
    %v359 = vadd.f32 %v295, %v343
    %v360 = vmul.f32 %v215, %v215
    %v361 = vmul.f32 %v216, %v216
    %v362 = vmul.f32 %v217, %v217
    %v363 = vmul.f32 %v218, %v218
    %v364 = vmul.f32 %v219, %v219
    %v365 = vmul.f32 %v220, %v220
    %v366 = vmul.f32 %v221, %v221
    %v367 = vmul.f32 %v222, %v222
    %v368 = vmul.f32 %v223, %v223
    %v369 = vmul.f32 %v224, %v224
    %v370 = vmul.f32 %v225, %v225
    %v371 = vmul.f32 %v226, %v226
    %v372 = vmul.f32 %v227, %v227
    %v373 = vmul.f32 %v228, %v228
    %v374 = vmul.f32 %v229, %v229
    %v375 = vmul.f32 %v230, %v230
    %v376 = vsel %vm247, %v360, 0.0
    %377 = vadd.xlane.f32.xlu0 %v376
    %v378 = vpop.xlane.xlu0 %377
    %v379 = vsel %vm247, %v361, 0.0
    %380 = vadd.xlane.f32.xlu0 %v379
    %v381 = vpop.xlane.xlu0 %380
    %v382 = vsel %vm247, %v362, 0.0
    %383 = vadd.xlane.f32.xlu0 %v382
    %v384 = vpop.xlane.xlu0 %383
    %v385 = vsel %vm247, %v363, 0.0
    %386 = vadd.xlane.f32.xlu0 %v385
    %v387 = vpop.xlane.xlu0 %386
    %v388 = vsel %vm247, %v364, 0.0
    %389 = vadd.xlane.f32.xlu0 %v388
    %v390 = vpop.xlane.xlu0 %389
    %v391 = vsel %vm247, %v365, 0.0
    %392 = vadd.xlane.f32.xlu0 %v391
    %v393 = vpop.xlane.xlu0 %392
    %v394 = vsel %vm247, %v366, 0.0
    %395 = vadd.xlane.f32.xlu0 %v394
    %v396 = vpop.xlane.xlu0 %395
    %v397 = vsel %vm247, %v367, 0.0
    %398 = vadd.xlane.f32.xlu0 %v397
    %v399 = vpop.xlane.xlu0 %398
    %v400 = vsel %vm247, %v368, 0.0
    %401 = vadd.xlane.f32.xlu0 %v400
    %v402 = vpop.xlane.xlu0 %401
    %v403 = vsel %vm247, %v369, 0.0
    %404 = vadd.xlane.f32.xlu0 %v403
    %v405 = vpop.xlane.xlu0 %404
    %v406 = vsel %vm247, %v370, 0.0
    %407 = vadd.xlane.f32.xlu0 %v406
    %v408 = vpop.xlane.xlu0 %407
    %v409 = vsel %vm247, %v371, 0.0
    %410 = vadd.xlane.f32.xlu0 %v409
    %v411 = vpop.xlane.xlu0 %410
    %v412 = vsel %vm247, %v372, 0.0
    %413 = vadd.xlane.f32.xlu0 %v412
    %v414 = vpop.xlane.xlu0 %413
    %v415 = vsel %vm247, %v373, 0.0
    %416 = vadd.xlane.f32.xlu0 %v415
    %v417 = vpop.xlane.xlu0 %416
    %v418 = vsel %vm247, %v374, 0.0
    %419 = vadd.xlane.f32.xlu0 %v418
    %v420 = vpop.xlane.xlu0 %419
    %v421 = vsel %vm247, %v375, 0.0
    %422 = vadd.xlane.f32.xlu0 %v421
    %v423 = vpop.xlane.xlu0 %422
    %v424 = vmul.f32 %v231, %v231
    %v425 = vmul.f32 %v232, %v232
    %v426 = vmul.f32 %v233, %v233
    %v427 = vmul.f32 %v234, %v234
    %v428 = vmul.f32 %v235, %v235
    %v429 = vmul.f32 %v236, %v236
    %v430 = vmul.f32 %v237, %v237
    %v431 = vmul.f32 %v238, %v238
    %v432 = vmul.f32 %v239, %v239
    %v433 = vmul.f32 %v240, %v240
    %v434 = vmul.f32 %v241, %v241
    %v435 = vmul.f32 %v242, %v242
    %v436 = vmul.f32 %v243, %v243
    %v437 = vmul.f32 %v244, %v244
    %v438 = vmul.f32 %v245, %v245
    %v439 = vmul.f32 %v246, %v246
    %v440 = vsel %vm247, %v424, 0.0
    %441 = vadd.xlane.f32.xlu0 %v440
    %v442 = vpop.xlane.xlu0 %441
    %v443 = vsel %vm247, %v425, 0.0
    %444 = vadd.xlane.f32.xlu0 %v443
    %v445 = vpop.xlane.xlu0 %444
    %v446 = vsel %vm247, %v426, 0.0
    %447 = vadd.xlane.f32.xlu0 %v446
    %v448 = vpop.xlane.xlu0 %447
    %v449 = vsel %vm247, %v427, 0.0
    %450 = vadd.xlane.f32.xlu0 %v449
    %v451 = vpop.xlane.xlu0 %450
    %v452 = vsel %vm247, %v428, 0.0
    %453 = vadd.xlane.f32.xlu0 %v452
    %v454 = vpop.xlane.xlu0 %453
    %v455 = vsel %vm247, %v429, 0.0
    %456 = vadd.xlane.f32.xlu0 %v455
    %v457 = vpop.xlane.xlu0 %456
    %v458 = vsel %vm247, %v430, 0.0
    %459 = vadd.xlane.f32.xlu0 %v458
    %v460 = vpop.xlane.xlu0 %459
    %v461 = vsel %vm247, %v431, 0.0
    %462 = vadd.xlane.f32.xlu0 %v461
    %v463 = vpop.xlane.xlu0 %462
    %v464 = vsel %vm247, %v432, 0.0
    %465 = vadd.xlane.f32.xlu0 %v464
    %v466 = vpop.xlane.xlu0 %465
    %v467 = vsel %vm247, %v433, 0.0
    %468 = vadd.xlane.f32.xlu0 %v467
    %v469 = vpop.xlane.xlu0 %468
    %v470 = vsel %vm247, %v434, 0.0
    %471 = vadd.xlane.f32.xlu0 %v470
    %v472 = vpop.xlane.xlu0 %471
    %v473 = vsel %vm247, %v435, 0.0
    %474 = vadd.xlane.f32.xlu0 %v473
    %v475 = vpop.xlane.xlu0 %474
    %v476 = vsel %vm247, %v436, 0.0
    %477 = vadd.xlane.f32.xlu0 %v476
    %v478 = vpop.xlane.xlu0 %477
    %v479 = vsel %vm247, %v437, 0.0
    %480 = vadd.xlane.f32.xlu0 %v479
    %v481 = vpop.xlane.xlu0 %480
    %v482 = vsel %vm247, %v438, 0.0
    %483 = vadd.xlane.f32.xlu0 %v482
    %v484 = vpop.xlane.xlu0 %483
    %v485 = vsel %vm247, %v439, 0.0
    %486 = vadd.xlane.f32.xlu0 %v485
    %v487 = vpop.xlane.xlu0 %486
    %v488 = vadd.f32 %v378, %v442
    %v489 = vadd.f32 %v381, %v445
    %v490 = vadd.f32 %v384, %v448
    %v491 = vadd.f32 %v387, %v451
    %v492 = vadd.f32 %v390, %v454
    %v493 = vadd.f32 %v393, %v457
    %v494 = vadd.f32 %v396, %v460
    %v495 = vadd.f32 %v399, %v463
    %v496 = vadd.f32 %v402, %v466
    %v497 = vadd.f32 %v405, %v469
    %v498 = vadd.f32 %v408, %v472
    %v499 = vadd.f32 %v411, %v475
    %v500 = vadd.f32 %v414, %v478
    %v501 = vadd.f32 %v417, %v481
    %v502 = vadd.f32 %v420, %v484
    %v503 = vadd.f32 %v423, %v487
    %v504 = vmul.f32 %v344, 0.0625
    %v505 = vmul.f32 %v345, 0.0625
    %v506 = vmul.f32 %v346, 0.0625
    %v507 = vmul.f32 %v347, 0.0625
    %v508 = vmul.f32 %v348, 0.0625
    %v509 = vmul.f32 %v349, 0.0625
    %v510 = vmul.f32 %v350, 0.0625
    %v511 = vmul.f32 %v351, 0.0625
    %v512 = vmul.f32 %v352, 0.0625
    %v513 = vmul.f32 %v353, 0.0625
    %v514 = vmul.f32 %v354, 0.0625
    %v515 = vmul.f32 %v355, 0.0625
    %v516 = vmul.f32 %v356, 0.0625
    %v517 = vmul.f32 %v357, 0.0625
    %v518 = vmul.f32 %v358, 0.0625
    %v519 = vmul.f32 %v359, 0.0625
    %v520 = vmul.f32 %v488, 0.0625
    %v521 = vmul.f32 %v489, 0.0625
    %v522 = vmul.f32 %v490, 0.0625
    %v523 = vmul.f32 %v491, 0.0625
    %v524 = vmul.f32 %v492, 0.0625
    %v525 = vmul.f32 %v493, 0.0625
    %v526 = vmul.f32 %v494, 0.0625
    %v527 = vmul.f32 %v495, 0.0625
    %v528 = vmul.f32 %v496, 0.0625
    %v529 = vmul.f32 %v497, 0.0625
    %v530 = vmul.f32 %v498, 0.0625
    %v531 = vmul.f32 %v499, 0.0625
    %v532 = vmul.f32 %v500, 0.0625
    %v533 = vmul.f32 %v501, 0.0625
    %v534 = vmul.f32 %v502, 0.0625
    %v535 = vmul.f32 %v503, 0.0625
    %v536 = vmul.f32 %v504, %v504
    %v537 = vmul.f32 %v505, %v505
    %v538 = vmul.f32 %v506, %v506
    %v539 = vmul.f32 %v507, %v507
    %v540 = vmul.f32 %v508, %v508
    %v541 = vmul.f32 %v509, %v509
    %v542 = vmul.f32 %v510, %v510
    %v543 = vmul.f32 %v511, %v511
    %v544 = vmul.f32 %v512, %v512
    %v545 = vmul.f32 %v513, %v513
    %v546 = vmul.f32 %v514, %v514
    %v547 = vmul.f32 %v515, %v515
    %v548 = vmul.f32 %v516, %v516
    %v549 = vmul.f32 %v517, %v517
    %v550 = vmul.f32 %v518, %v518
    %v551 = vmul.f32 %v519, %v519
    %v552 = vsub.f32 %v520, %v536
    %v553 = vsub.f32 %v521, %v537
    %v554 = vsub.f32 %v522, %v538
    %v555 = vsub.f32 %v523, %v539
    %v556 = vsub.f32 %v524, %v540
    %v557 = vsub.f32 %v525, %v541
    %v558 = vsub.f32 %v526, %v542
    %v559 = vsub.f32 %v527, %v543
    %v560 = vsub.f32 %v528, %v544
    %v561 = vsub.f32 %v529, %v545
    %v562 = vsub.f32 %v530, %v546
    %v563 = vsub.f32 %v531, %v547
    %v564 = vsub.f32 %v532, %v548
    %v565 = vsub.f32 %v533, %v549
    %v566 = vsub.f32 %v534, %v550
    %v567 = vsub.f32 %v535, %v551
    %v568 = vmax.f32 %v552, 0.0
    %v569 = vmax.f32 %v553, 0.0
    %v570 = vmax.f32 %v554, 0.0
    %v571 = vmax.f32 %v555, 0.0
    %v572 = vmax.f32 %v556, 0.0
    %v573 = vmax.f32 %v557, 0.0
    %v574 = vmax.f32 %v558, 0.0
    %v575 = vmax.f32 %v559, 0.0
    %v576 = vmax.f32 %v560, 0.0
    %v577 = vmax.f32 %v561, 0.0
    %v578 = vmax.f32 %v562, 0.0
    %v579 = vmax.f32 %v563, 0.0
    %v580 = vmax.f32 %v564, 0.0
    %v581 = vmax.f32 %v565, 0.0
    %v582 = vmax.f32 %v566, 0.0
    %v583 = vmax.f32 %v567, 0.0
    %v584 = vadd.f32 %v568, 1e-05
    %v585 = vadd.f32 %v569, 1e-05
    %v586 = vadd.f32 %v570, 1e-05
    %v587 = vadd.f32 %v571, 1e-05
    %v588 = vadd.f32 %v572, 1e-05
    %v589 = vadd.f32 %v573, 1e-05
    %v590 = vadd.f32 %v574, 1e-05
    %v591 = vadd.f32 %v575, 1e-05
    %v592 = vadd.f32 %v576, 1e-05
    %v593 = vadd.f32 %v577, 1e-05
    %v594 = vadd.f32 %v578, 1e-05
    %v595 = vadd.f32 %v579, 1e-05
    %v596 = vadd.f32 %v580, 1e-05
    %v597 = vadd.f32 %v581, 1e-05
    %v598 = vadd.f32 %v582, 1e-05
    %v599 = vadd.f32 %v583, 1e-05
    %v600 = vrsqrt.pop %v584
    %v601 = vmul.f32 %v600, %v584
    %v602 = vmul.f32 %v601, %v600
    %v603 = vmul.f32 0.5, %v602
    %v604 = vsub.f32 1.5, %v603
    %v605 = vmul.f32 %v600, %v604
    %vm606 = vweird.f32 %v584
    %vm607 = vweird.f32 %v600
    %vm608 = vmor %vm606, %vm607
    %v609 = vsel %vm608, %v600, %v605
    %v610 = vrsqrt.pop %v585
    %v611 = vmul.f32 %v610, %v585
    %v612 = vmul.f32 %v611, %v610
    %v613 = vmul.f32 0.5, %v612
    %v614 = vsub.f32 1.5, %v613
    %v615 = vmul.f32 %v610, %v614
    %vm616 = vweird.f32 %v585
    %vm617 = vweird.f32 %v610
    %vm618 = vmor %vm616, %vm617
    %v619 = vsel %vm618, %v610, %v615
    %v620 = vrsqrt.pop %v586
    %v621 = vmul.f32 %v620, %v586
    %v622 = vmul.f32 %v621, %v620
    %v623 = vmul.f32 0.5, %v622
    %v624 = vsub.f32 1.5, %v623
    %v625 = vmul.f32 %v620, %v624
    %vm626 = vweird.f32 %v586
    %vm627 = vweird.f32 %v620
    %vm628 = vmor %vm626, %vm627
    %v629 = vsel %vm628, %v620, %v625
    %v630 = vrsqrt.pop %v587
    %v631 = vmul.f32 %v630, %v587
    %v632 = vmul.f32 %v631, %v630
    %v633 = vmul.f32 0.5, %v632
    %v634 = vsub.f32 1.5, %v633
    %v635 = vmul.f32 %v630, %v634
    %vm636 = vweird.f32 %v587
    %vm637 = vweird.f32 %v630
    %vm638 = vmor %vm636, %vm637
    %v639 = vsel %vm638, %v630, %v635
    %v640 = vrsqrt.pop %v588
    %v641 = vmul.f32 %v640, %v588
    %v642 = vmul.f32 %v641, %v640
    %v643 = vmul.f32 0.5, %v642
    %v644 = vsub.f32 1.5, %v643
    %v645 = vmul.f32 %v640, %v644
    %vm646 = vweird.f32 %v588
    %vm647 = vweird.f32 %v640
    %vm648 = vmor %vm646, %vm647
    %v649 = vsel %vm648, %v640, %v645
    %v650 = vrsqrt.pop %v589
    %v651 = vmul.f32 %v650, %v589
    %v652 = vmul.f32 %v651, %v650
    %v653 = vmul.f32 0.5, %v652
    %v654 = vsub.f32 1.5, %v653
    %v655 = vmul.f32 %v650, %v654
    %vm656 = vweird.f32 %v589
    %vm657 = vweird.f32 %v650
    %vm658 = vmor %vm656, %vm657
    %v659 = vsel %vm658, %v650, %v655
    %v660 = vrsqrt.pop %v590
    %v661 = vmul.f32 %v660, %v590
    %v662 = vmul.f32 %v661, %v660
    %v663 = vmul.f32 0.5, %v662
    %v664 = vsub.f32 1.5, %v663
    %v665 = vmul.f32 %v660, %v664
    %vm666 = vweird.f32 %v590
    %vm667 = vweird.f32 %v660
    %vm668 = vmor %vm666, %vm667
    %v669 = vsel %vm668, %v660, %v665
    %v670 = vrsqrt.pop %v591
    %v671 = vmul.f32 %v670, %v591
    %v672 = vmul.f32 %v671, %v670
    %v673 = vmul.f32 0.5, %v672
    %v674 = vsub.f32 1.5, %v673
    %v675 = vmul.f32 %v670, %v674
    %vm676 = vweird.f32 %v591
    %vm677 = vweird.f32 %v670
    %vm678 = vmor %vm676, %vm677
    %v679 = vsel %vm678, %v670, %v675
    %v680 = vrsqrt.pop %v592
    %v681 = vmul.f32 %v680, %v592
    %v682 = vmul.f32 %v681, %v680
    %v683 = vmul.f32 0.5, %v682
    %v684 = vsub.f32 1.5, %v683
    %v685 = vmul.f32 %v680, %v684
    %vm686 = vweird.f32 %v592
    %vm687 = vweird.f32 %v680
    %vm688 = vmor %vm686, %vm687
    %v689 = vsel %vm688, %v680, %v685
    %v690 = vrsqrt.pop %v593
    %v691 = vmul.f32 %v690, %v593
    %v692 = vmul.f32 %v691, %v690
    %v693 = vmul.f32 0.5, %v692
    %v694 = vsub.f32 1.5, %v693
    %v695 = vmul.f32 %v690, %v694
    %vm696 = vweird.f32 %v593
    %vm697 = vweird.f32 %v690
    %vm698 = vmor %vm696, %vm697
    %v699 = vsel %vm698, %v690, %v695
    %v700 = vrsqrt.pop %v594
    %v701 = vmul.f32 %v700, %v594
    %v702 = vmul.f32 %v701, %v700
    %v703 = vmul.f32 0.5, %v702
    %v704 = vsub.f32 1.5, %v703
    %v705 = vmul.f32 %v700, %v704
    %vm706 = vweird.f32 %v594
    %vm707 = vweird.f32 %v700
    %vm708 = vmor %vm706, %vm707
    %v709 = vsel %vm708, %v700, %v705
    %v710 = vrsqrt.pop %v595
    %v711 = vmul.f32 %v710, %v595
    %v712 = vmul.f32 %v711, %v710
    %v713 = vmul.f32 0.5, %v712
    %v714 = vsub.f32 1.5, %v713
    %v715 = vmul.f32 %v710, %v714
    %vm716 = vweird.f32 %v595
    %vm717 = vweird.f32 %v710
    %vm718 = vmor %vm716, %vm717
    %v719 = vsel %vm718, %v710, %v715
    %v720 = vrsqrt.pop %v596
    %v721 = vmul.f32 %v720, %v596
    %v722 = vmul.f32 %v721, %v720
    %v723 = vmul.f32 0.5, %v722
    %v724 = vsub.f32 1.5, %v723
    %v725 = vmul.f32 %v720, %v724
    %vm726 = vweird.f32 %v596
    %vm727 = vweird.f32 %v720
    %vm728 = vmor %vm726, %vm727
    %v729 = vsel %vm728, %v720, %v725
    %v730 = vrsqrt.pop %v597
    %v731 = vmul.f32 %v730, %v597
    %v732 = vmul.f32 %v731, %v730
    %v733 = vmul.f32 0.5, %v732
    %v734 = vsub.f32 1.5, %v733
    %v735 = vmul.f32 %v730, %v734
    %vm736 = vweird.f32 %v597
    %vm737 = vweird.f32 %v730
    %vm738 = vmor %vm736, %vm737
    %v739 = vsel %vm738, %v730, %v735
    %v740 = vrsqrt.pop %v598
    %v741 = vmul.f32 %v740, %v598
    %v742 = vmul.f32 %v741, %v740
    %v743 = vmul.f32 0.5, %v742
    %v744 = vsub.f32 1.5, %v743
    %v745 = vmul.f32 %v740, %v744
    %vm746 = vweird.f32 %v598
    %vm747 = vweird.f32 %v740
    %vm748 = vmor %vm746, %vm747
    %v749 = vsel %vm748, %v740, %v745
    %v750 = vrsqrt.pop %v599
    %v751 = vmul.f32 %v750, %v599
    %v752 = vmul.f32 %v751, %v750
    %v753 = vmul.f32 0.5, %v752
    %v754 = vsub.f32 1.5, %v753
    %v755 = vmul.f32 %v750, %v754
    %vm756 = vweird.f32 %v599
    %vm757 = vweird.f32 %v750
    %vm758 = vmor %vm756, %vm757
    %v759 = vsel %vm758, %v750, %v755
    %v760 = vpack.c.bf16 %v215, %v215
    %v761 = vpack.c.bf16 %v216, %v216
    %v762 = vpack.c.bf16 %v217, %v217
    %v763 = vpack.c.bf16 %v218, %v218
    %v764 = vpack.c.bf16 %v219, %v219
    %v765 = vpack.c.bf16 %v220, %v220
    %v766 = vpack.c.bf16 %v221, %v221
    %v767 = vpack.c.bf16 %v222, %v222
    %v768 = vpack.c.bf16 %v223, %v223
    %v769 = vpack.c.bf16 %v224, %v224
    %v770 = vpack.c.bf16 %v225, %v225
    %v771 = vpack.c.bf16 %v226, %v226
    %v772 = vpack.c.bf16 %v227, %v227
    %v773 = vpack.c.bf16 %v228, %v228
    %v774 = vpack.c.bf16 %v229, %v229
    %v775 = vpack.c.bf16 %v230, %v230
    %v776 = vpack.c.bf16 %v231, %v231
    %v777 = vpack.c.bf16 %v232, %v232
    %v778 = vpack.c.bf16 %v233, %v233
    %v779 = vpack.c.bf16 %v234, %v234
    %v780 = vpack.c.bf16 %v235, %v235
    %v781 = vpack.c.bf16 %v236, %v236
    %v782 = vpack.c.bf16 %v237, %v237
    %v783 = vpack.c.bf16 %v238, %v238
    %v784 = vpack.c.bf16 %v239, %v239
    %v785 = vpack.c.bf16 %v240, %v240
    %v786 = vpack.c.bf16 %v241, %v241
    %v787 = vpack.c.bf16 %v242, %v242
    %v788 = vpack.c.bf16 %v243, %v243
    %v789 = vpack.c.bf16 %v244, %v244
    %v790 = vpack.c.bf16 %v245, %v245
    %v791 = vpack.c.bf16 %v246, %v246
    %v792 = vld [vmem:[%s2] sm:$0xf]
    %v793 = vld [vmem:[%s3] sm:$0xf]
    %v810 = vunpack.c.l.b16 %v776
    %v811 = vunpack.c.l.b16 %v777
    %v812 = vunpack.c.l.b16 %v778
    %v813 = vunpack.c.l.b16 %v779
    %v814 = vunpack.c.l.b16 %v780
    %v815 = vunpack.c.l.b16 %v781
    %v816 = vunpack.c.l.b16 %v782
    %v817 = vunpack.c.l.b16 %v783
    %v818 = vunpack.c.l.b16 %v784
    %v819 = vunpack.c.l.b16 %v785
    %v820 = vunpack.c.l.b16 %v786
    %v821 = vunpack.c.l.b16 %v787
    %v822 = vunpack.c.l.b16 %v788
    %v823 = vunpack.c.l.b16 %v789
    %v824 = vunpack.c.l.b16 %v790
    %v825 = vunpack.c.l.b16 %v791
    %v826 = vpack.c.b16 %v811, %v810
    %v827 = vpack.c.b16 %v813, %v812
    %v828 = vpack.c.b16 %v815, %v814
    %v829 = vpack.c.b16 %v817, %v816
    %v830 = vpack.c.b16 %v819, %v818
    %v831 = vpack.c.b16 %v821, %v820
    %v832 = vpack.c.b16 %v823, %v822
    %v833 = vpack.c.b16 %v825, %v824
    %v835 = vsel %vm247, %v826, 0
    %v838 = vsel %vm247, %v827, 0
    %v841 = vsel %vm247, %v828, 0
    %v844 = vsel %vm247, %v829, 0
    %v847 = vsel %vm247, %v830, 0
    %v850 = vsel %vm247, %v831, 0
    %v853 = vsel %vm247, %v832, 0
    %v856 = vsel %vm247, %v833, 0
    %vm858 = vcmask 1043456
    %v860 = vsel %vm858, %v793, 0
    %862 = vmatpush.bf16.msra.mxu0 0
    %863 = vmatpush.bf16.msra.mxu0 0
    %864 = vmatpush.bf16.msra.mxu0 0
    %865 = vmatpush.bf16.msra.mxu0 0
    %866 = vmatpush.bf16.msra.mxu0 0
    %867 = vmatpush.bf16.msra.mxu0 0
    %868 = vmatpush.bf16.msra.mxu0 0
    %869 = vmatpush.bf16.msra.mxu0 %v860
    %870 = vmatmul.bf16.gmra.mxu0 %v835
    %v871 = vpop.f32.mrf.mxu0
    %v872 = vadd.f32 0.0, %v871
    %v873 = vpop.f32.mrf.mxu0
    %v874 = vadd.f32 0.0, %v873
    %875 = vmatmul.bf16.gmra.mxu0 %v838
    %v876 = vpop.f32.mrf.mxu0
    %v877 = vadd.f32 0.0, %v876
    %v878 = vpop.f32.mrf.mxu0
    %v879 = vadd.f32 0.0, %v878
    %880 = vmatmul.bf16.gmra.mxu0 %v841
    %v881 = vpop.f32.mrf.mxu0
    %v882 = vadd.f32 0.0, %v881
    %v883 = vpop.f32.mrf.mxu0
    %v884 = vadd.f32 0.0, %v883
    %885 = vmatmul.bf16.gmra.mxu0 %v844
    %v886 = vpop.f32.mrf.mxu0
    %v887 = vadd.f32 0.0, %v886
    %v888 = vpop.f32.mrf.mxu0
    %v889 = vadd.f32 0.0, %v888
    %890 = vmatmul.bf16.gmra.mxu0 %v847
    %v891 = vpop.f32.mrf.mxu0
    %v892 = vadd.f32 0.0, %v891
    %v893 = vpop.f32.mrf.mxu0
    %v894 = vadd.f32 0.0, %v893
    %895 = vmatmul.bf16.gmra.mxu0 %v850
    %v896 = vpop.f32.mrf.mxu0
    %v897 = vadd.f32 0.0, %v896
    %v898 = vpop.f32.mrf.mxu0
    %v899 = vadd.f32 0.0, %v898
    %900 = vmatmul.bf16.gmra.mxu0 %v853
    %v901 = vpop.f32.mrf.mxu0
    %v902 = vadd.f32 0.0, %v901
    %v903 = vpop.f32.mrf.mxu0
    %v904 = vadd.f32 0.0, %v903
    %905 = vmatmul.bf16.gmra.mxu0 %v856
    %v906 = vpop.f32.mrf.mxu0
    %v907 = vadd.f32 0.0, %v906
    %v908 = vpop.f32.mrf.mxu0
    %v909 = vadd.f32 0.0, %v908
    %910 = vdwg.mxu0
    %v927 = vunpack.c.l.b16 %v760
    %v928 = vunpack.c.l.b16 %v761
    %v929 = vunpack.c.l.b16 %v762
    %v930 = vunpack.c.l.b16 %v763
    %v931 = vunpack.c.l.b16 %v764
    %v932 = vunpack.c.l.b16 %v765
    %v933 = vunpack.c.l.b16 %v766
    %v934 = vunpack.c.l.b16 %v767
    %v935 = vunpack.c.l.b16 %v768
    %v936 = vunpack.c.l.b16 %v769
    %v937 = vunpack.c.l.b16 %v770
    %v938 = vunpack.c.l.b16 %v771
    %v939 = vunpack.c.l.b16 %v772
    %v940 = vunpack.c.l.b16 %v773
    %v941 = vunpack.c.l.b16 %v774
    %v942 = vunpack.c.l.b16 %v775
    %v943 = vpack.c.b16 %v928, %v927
    %v944 = vpack.c.b16 %v930, %v929
    %v945 = vpack.c.b16 %v932, %v931
    %v946 = vpack.c.b16 %v934, %v933
    %v947 = vpack.c.b16 %v936, %v935
    %v948 = vpack.c.b16 %v938, %v937
    %v949 = vpack.c.b16 %v940, %v939
    %v950 = vpack.c.b16 %v942, %v941
    %v952 = vsel %vm247, %v943, 0
    %v955 = vsel %vm247, %v944, 0
    %v958 = vsel %vm247, %v945, 0
    %v961 = vsel %vm247, %v946, 0
    %v964 = vsel %vm247, %v947, 0
    %v967 = vsel %vm247, %v948, 0
    %v970 = vsel %vm247, %v949, 0
    %v973 = vsel %vm247, %v950, 0
    %v976 = vsel %vm858, %v792, 0
    %978 = vmatpush.bf16.msra.mxu0 0
    %979 = vmatpush.bf16.msra.mxu0 0
    %980 = vmatpush.bf16.msra.mxu0 0
    %981 = vmatpush.bf16.msra.mxu0 0
    %982 = vmatpush.bf16.msra.mxu0 0
    %983 = vmatpush.bf16.msra.mxu0 0
    %984 = vmatpush.bf16.msra.mxu0 0
    %985 = vmatpush.bf16.msra.mxu0 %v976
    %986 = vmatmul.bf16.gmra.mxu0 %v952
    %v987 = vpop.f32.mrf.mxu0
    %v988 = vadd.f32 %v872, %v987
    %v989 = vpop.f32.mrf.mxu0
    %v990 = vadd.f32 %v874, %v989
    %991 = vmatmul.bf16.gmra.mxu0 %v955
    %v992 = vpop.f32.mrf.mxu0
    %v993 = vadd.f32 %v877, %v992
    %v994 = vpop.f32.mrf.mxu0
    %v995 = vadd.f32 %v879, %v994
    %996 = vmatmul.bf16.gmra.mxu0 %v958
    %v997 = vpop.f32.mrf.mxu0
    %v998 = vadd.f32 %v882, %v997
    %v999 = vpop.f32.mrf.mxu0
    %v1000 = vadd.f32 %v884, %v999
    %1001 = vmatmul.bf16.gmra.mxu0 %v961
    %v1002 = vpop.f32.mrf.mxu0
    %v1003 = vadd.f32 %v887, %v1002
    %v1004 = vpop.f32.mrf.mxu0
    %v1005 = vadd.f32 %v889, %v1004
    %1006 = vmatmul.bf16.gmra.mxu0 %v964
    %v1007 = vpop.f32.mrf.mxu0
    %v1008 = vadd.f32 %v892, %v1007
    %v1009 = vpop.f32.mrf.mxu0
    %v1010 = vadd.f32 %v894, %v1009
    %1011 = vmatmul.bf16.gmra.mxu0 %v967
    %v1012 = vpop.f32.mrf.mxu0
    %v1013 = vadd.f32 %v897, %v1012
    %v1014 = vpop.f32.mrf.mxu0
    %v1015 = vadd.f32 %v899, %v1014
    %1016 = vmatmul.bf16.gmra.mxu0 %v970
    %v1017 = vpop.f32.mrf.mxu0
    %v1018 = vadd.f32 %v902, %v1017
    %v1019 = vpop.f32.mrf.mxu0
    %v1020 = vadd.f32 %v904, %v1019
    %1021 = vmatmul.bf16.gmra.mxu0 %v973
    %v1022 = vpop.f32.mrf.mxu0
    %v1023 = vadd.f32 %v907, %v1022
    %v1024 = vpop.f32.mrf.mxu0
    %v1025 = vadd.f32 %v909, %v1024
    %1026 = vdwg.mxu0
    %v1027 = vld [vmem:[%s4] sm:$0x1]
    %v1029 = vperm.slane %v1027, 0
    %v1031 = vmul.f32 %v504, %v1029
    %v1032 = vmul.f32 %v505, %v1029
    %v1033 = vmul.f32 %v506, %v1029
    %v1034 = vmul.f32 %v507, %v1029
    %v1035 = vmul.f32 %v508, %v1029
    %v1036 = vmul.f32 %v509, %v1029
    %v1037 = vmul.f32 %v510, %v1029
    %v1038 = vmul.f32 %v511, %v1029
    %v1039 = vmul.f32 %v512, %v1029
    %v1040 = vmul.f32 %v513, %v1029
    %v1041 = vmul.f32 %v514, %v1029
    %v1042 = vmul.f32 %v515, %v1029
    %v1043 = vmul.f32 %v516, %v1029
    %v1044 = vmul.f32 %v517, %v1029
    %v1045 = vmul.f32 %v518, %v1029
    %v1046 = vmul.f32 %v519, %v1029
    %v1047 = vsub.f32 %v988, %v1031
    %v1048 = vsub.f32 %v990, %v1032
    %v1049 = vsub.f32 %v993, %v1033
    %v1050 = vsub.f32 %v995, %v1034
    %v1051 = vsub.f32 %v998, %v1035
    %v1052 = vsub.f32 %v1000, %v1036
    %v1053 = vsub.f32 %v1003, %v1037
    %v1054 = vsub.f32 %v1005, %v1038
    %v1055 = vsub.f32 %v1008, %v1039
    %v1056 = vsub.f32 %v1010, %v1040
    %v1057 = vsub.f32 %v1013, %v1041
    %v1058 = vsub.f32 %v1015, %v1042
    %v1059 = vsub.f32 %v1018, %v1043
    %v1060 = vsub.f32 %v1020, %v1044
    %v1061 = vsub.f32 %v1023, %v1045
    %v1062 = vsub.f32 %v1025, %v1046
    %v1063 = vmul.f32 %v609, %v1047
    %v1064 = vmul.f32 %v619, %v1048
    %v1065 = vmul.f32 %v629, %v1049
    %v1066 = vmul.f32 %v639, %v1050
    %v1067 = vmul.f32 %v649, %v1051
    %v1068 = vmul.f32 %v659, %v1052
    %v1069 = vmul.f32 %v669, %v1053
    %v1070 = vmul.f32 %v679, %v1054
    %v1071 = vmul.f32 %v689, %v1055
    %v1072 = vmul.f32 %v699, %v1056
    %v1073 = vmul.f32 %v709, %v1057
    %v1074 = vmul.f32 %v719, %v1058
    %v1075 = vmul.f32 %v729, %v1059
    %v1076 = vmul.f32 %v739, %v1060
    %v1077 = vmul.f32 %v749, %v1061
    %v1078 = vmul.f32 %v759, %v1062
    %v1079 = vld [vmem:[%s5] sm:$0x1]
    %v1081 = vperm.slane %v1079, 0
    %v1083 = vadd.f32 %v1063, %v1081
    %v1084 = vadd.f32 %v1064, %v1081
    %v1085 = vadd.f32 %v1065, %v1081
    %v1086 = vadd.f32 %v1066, %v1081
    %v1087 = vadd.f32 %v1067, %v1081
    %v1088 = vadd.f32 %v1068, %v1081
    %v1089 = vadd.f32 %v1069, %v1081
    %v1090 = vadd.f32 %v1070, %v1081
    %v1091 = vadd.f32 %v1071, %v1081
    %v1092 = vadd.f32 %v1072, %v1081
    %v1093 = vadd.f32 %v1073, %v1081
    %v1094 = vadd.f32 %v1074, %v1081
    %v1095 = vadd.f32 %v1075, %v1081
    %v1096 = vadd.f32 %v1076, %v1081
    %v1097 = vadd.f32 %v1077, %v1081
    %v1098 = vadd.f32 %v1078, %v1081
    %1099 = vst.msk [vmem:[%s6] sm:$0xff] %vm247, %v1083
    %1100 = vst.msk [vmem:[%s6 + $0x8] sm:$0xff] %vm247, %v1084
    %1101 = vst.msk [vmem:[%s6 + $0x10] sm:$0xff] %vm247, %v1085
    %1102 = vst.msk [vmem:[%s6 + $0x18] sm:$0xff] %vm247, %v1086
    %1103 = vst.msk [vmem:[%s6 + $0x20] sm:$0xff] %vm247, %v1087
    %1104 = vst.msk [vmem:[%s6 + $0x28] sm:$0xff] %vm247, %v1088
    %1105 = vst.msk [vmem:[%s6 + $0x30] sm:$0xff] %vm247, %v1089
    %1106 = vst.msk [vmem:[%s6 + $0x38] sm:$0xff] %vm247, %v1090
    %1107 = vst.msk [vmem:[%s6 + $0x40] sm:$0xff] %vm247, %v1091
    %1108 = vst.msk [vmem:[%s6 + $0x48] sm:$0xff] %vm247, %v1092
    %1109 = vst.msk [vmem:[%s6 + $0x50] sm:$0xff] %vm247, %v1093
    %1110 = vst.msk [vmem:[%s6 + $0x58] sm:$0xff] %vm247, %v1094
    %1111 = vst.msk [vmem:[%s6 + $0x60] sm:$0xff] %vm247, %v1095
    %1112 = vst.msk [vmem:[%s6 + $0x68] sm:$0xff] %vm247, %v1096
    %1113 = vst.msk [vmem:[%s6 + $0x70] sm:$0xff] %vm247, %v1097
    %1114 = vst.msk [vmem:[%s6 + $0x78] sm:$0xff] %vm247, %v1098
    // Predicated region
    $region102: #{tpu_custom_call.1} parent=1 // pred_check
      _
    $region103: #{tpu_custom_call.1} parent=1 // pred_check_branch
      %1116 = sbr.rel (0) target = $region105
    $region104: #{tpu_custom_call.1} parent=1 // pred_region
      _
    $region105: #{tpu_custom_call.1} parent=1 // pred_fallthru
      _
    // Predicated region
    $region106: #{tpu_custom_call.1} parent=1 // pred_check
      _
    $region107: #{tpu_custom_call.1} parent=1 // pred_check_branch
      %1118 = sbr.rel (0) target = $region109
    $region108: #{tpu_custom_call.1} parent=1 // pred_region
      _
    $region109: #{tpu_custom_call.1} parent=1 // pred_fallthru
      _

</llo_original>
